<compile_context>
chip_gen: v7x
topology: tpu7x:2x2x1
jax: 0.10.0
libtpu: 0.0.40
codegen_flags: <defaults>
</compile_context>

<pallas_src>
import jax
import jax.numpy as jnp
from jax import lax
from jax.experimental import pallas as pl
from jax.experimental.pallas import tpu as pltpu

LN_EPS = 1e-5                  # torch F.layer_norm default eps
_LANE = 128
_SUBLANE = 8
_MAX_BATCH_TILE = 256
_VMEM_FLOOR = 32 * 1024 * 1024
_VMEM_CEIL = 48 * 1024 * 1024  # leaves headroom under v7x's 64 MiB physical
_MASK_VAL = -1e30


def _round_up(n, m):
    return ((n + m - 1) // m) * m


def _row_idx(i):
    return (i, 0)


def _fixed_idx(i):
    return (0, 0)


def _layer_norm(x, valid):
    """LayerNorm over the last axis counting only the first `valid` columns.

    Requires columns >= `valid` to be exactly zero pre-normalization (zero-
    padded weight/bias columns guarantee this), so the full-width sum equals
    the valid-width sum.  Two-pass (numerically safe) variance; the padded
    columns' (0 - mean)^2 contribution is removed analytically.
    """
    width = x.shape[-1]
    inv_n = 1.0 / float(valid)
    mean = jnp.sum(x, axis=-1, keepdims=True) * inv_n
    centered = x - mean
    sum_sq = jnp.sum(centered * centered, axis=-1, keepdims=True)
    var = (sum_sq - float(width - valid) * mean * mean) * inv_n
    return centered * lax.rsqrt(var + LN_EPS)


# ---------------------------------------------------------------------------
# Fused kernel: projections + parent classifier + argmax + all child levels
# ---------------------------------------------------------------------------
def _make_fused_kernel(*, embed_dim, num_parents, parents_pad, children):
    num_levels = len(children)
    n_in = 7 + 3 * num_levels

    def kernel(*refs):
        (x_ref, wp_ref, bp_ref, wc_ref, bc_ref, wpc_ref, bpc_ref) = refs[:7]
        lvl_in = refs[7:n_in]
        pe_ref, ce_ref, plog_ref = refs[n_in:n_in + 3]
        child_refs = refs[n_in + 3:]

        x = x_ref[...]                                        # (TB, K)
        pe = _layer_norm(
            jnp.dot(x, wp_ref[...], preferred_element_type=jnp.float32)
            + bp_ref[...], embed_dim)
        ce = _layer_norm(
            jnp.dot(x, wc_ref[...], preferred_element_type=jnp.float32)
            + bc_ref[...], embed_dim)
        plog = _layer_norm(
            jnp.dot(pe, wpc_ref[...], preferred_element_type=jnp.float32)
            + bpc_ref[...], num_parents)
        pe_ref[...] = pe
        ce_ref[...] = ce
        plog_ref[...] = plog

        # In-kernel argmax over the valid parent lanes; ties resolve to the
        # first index (matches torch.argmax).  Padded lanes masked out.
        pcol = lax.broadcasted_iota(jnp.int32, plog.shape, 1)      # (TB, Ppad)
        masked = jnp.where(pcol < num_parents, plog, _MASK_VAL)
        row_max = jnp.max(masked, axis=-1, keepdims=True)
        cand = jnp.where(masked >= row_max,
                         pcol.astype(jnp.float32), float(parents_pad))
        parent_idx = jnp.min(cand, axis=-1, keepdims=True).astype(jnp.int32)

        for l in range(num_levels):
            wd_ref, bd_ref, fm_ref = lvl_in[3 * l:3 * l + 3]
            c = children[l]
            # Dense logits for every parent head at once: (TB, P*C_pad).
            dense = jnp.dot(ce, wd_ref[...],
                            preferred_element_type=jnp.float32) + bd_ref[...]
            # Select the chosen parent's C columns with an iota lane mask
            # (no mask matmul, no per-sample weight DMA).
            ccol = lax.broadcasted_iota(jnp.int32, dense.shape, 1)
            start = parent_idx * c
            sel_mask = jnp.logical_and(ccol >= start, ccol < start + c)
            # Fold the selected block into lane-dense (TB, C_pad) on the MXU.
            sel = jnp.dot(jnp.where(sel_mask, dense, 0.0), fm_ref[...],
                          preferred_element_type=jnp.float32)
            child_refs[l][...] = _layer_norm(sel, c)

    return kernel


# ---------------------------------------------------------------------------
# One-time parameter preparation (padding + (P,D,C)->(D,P*C) densification)
# ---------------------------------------------------------------------------
def prepare_params(params):
    """Run ONCE (e.g. after loading weights), not per forward call."""
    wp = params["parent_proj_w"]          # (K, D)
    wc = params["child_proj_w"]           # (K, D)
    wpc = params["parent_cls_w"]          # (D, P)
    k, d = wp.shape
    p = wpc.shape[1]
    d_pad = _round_up(d, _LANE)
    p_pad = _round_up(p, _LANE)

    def pad2(a, rows, cols):
        return jnp.pad(a, ((0, rows - a.shape[0]), (0, cols - a.shape[1])))

    arrays = {
        "wp": pad2(wp, k, d_pad),
        "bp": pad2(params["parent_proj_b"], 1, d_pad),
        "wc": pad2(wc, k, d_pad),
        "bc": pad2(params["child_proj_b"], 1, d_pad),
        "wpc": pad2(wpc, d_pad, p_pad),          # padded rows AND cols are 0
        "bpc": pad2(params["parent_cls_b"], 1, p_pad),
        "wd": [], "bd": [], "fm": [],
    }
    children, pc_pads, c_pads = [], [], []
    for w_stack, b_stack in zip(params["child_cls_w"], params["child_cls_b"]):
        pw, dw, c = w_stack.shape
        assert pw == p and dw == d
        pc = pw * c
        pc_pad = _round_up(pc, _LANE)
        c_pad = _round_up(c, _LANE)
        # (P, D, C) -> (D, P*C); column index p*C + c.
        w_dense = jnp.transpose(w_stack, (1, 0, 2)).reshape(d, pc)
        b_dense = b_stack.reshape(1, pc)
        # Fold matrix: sums the P blocks into C columns (only one block is
        # nonzero after masking), zero-padded to C_pad lanes.
        fold = jnp.tile(jnp.eye(c, dtype=jnp.float32), (pw, 1))   # (P*C, C)
        arrays["wd"].append(pad2(w_dense, d_pad, pc_pad))
        arrays["bd"].append(pad2(b_dense, 1, pc_pad))
        arrays["fm"].append(pad2(fold, pc_pad, c_pad))
        children.append(c)
        pc_pads.append(pc_pad)
        c_pads.append(c_pad)

    meta = {
        "input_dim": k, "embed_dim": d, "embed_pad": d_pad,
        "num_parents": p, "parents_pad": p_pad,
        "children": tuple(children), "pc_pads": tuple(pc_pads),
        "c_pads": tuple(c_pads),
    }
    return arrays, meta


# ---------------------------------------------------------------------------
# Module wrapper (mirrors JEHierarchicalClassifier.forward, eval mode)
# ---------------------------------------------------------------------------
def je_hierarchical_classifier_forward(x, arrays, meta):
    b, k = x.shape
    assert k == meta["input_dim"]
    d, d_pad = meta["embed_dim"], meta["embed_pad"]
    p, p_pad = meta["num_parents"], meta["parents_pad"]
    children, pc_pads, c_pads = meta["children"], meta["pc_pads"], meta["c_pads"]
    num_levels = len(children)

    # Batch tile: keep >= 2 grid steps when B > 8 so the "parallel" axis can
    # be sharded across both TensorCores on v7x.
    if b <= _SUBLANE:
        tb = _SUBLANE
    else:
        tb = min(_round_up((b + 1) // 2, _SUBLANE), _MAX_BATCH_TILE)
    b_pad = _round_up(b, tb)
    nb = b_pad // tb

    x_pad = jnp.pad(x, ((0, b_pad - b), (0, 0)))

    kernel = _make_fused_kernel(embed_dim=d, num_parents=p,
                                parents_pad=p_pad, children=children)

    in_specs = [
        pl.BlockSpec((tb, k), _row_idx),
        pl.BlockSpec((k, d_pad), _fixed_idx),
        pl.BlockSpec((1, d_pad), _fixed_idx),
        pl.BlockSpec((k, d_pad), _fixed_idx),
        pl.BlockSpec((1, d_pad), _fixed_idx),
        pl.BlockSpec((d_pad, p_pad), _fixed_idx),
        pl.BlockSpec((1, p_pad), _fixed_idx),
    ]
    args = [x_pad, arrays["wp"], arrays["bp"], arrays["wc"], arrays["bc"],
            arrays["wpc"], arrays["bpc"]]
    for l in range(num_levels):
        in_specs += [
            pl.BlockSpec((d_pad, pc_pads[l]), _fixed_idx),
            pl.BlockSpec((1, pc_pads[l]), _fixed_idx),
            pl.BlockSpec((pc_pads[l], c_pads[l]), _fixed_idx),
        ]
        args += [arrays["wd"][l], arrays["bd"][l], arrays["fm"][l]]

    out_specs = [
        pl.BlockSpec((tb, d_pad), _row_idx),
        pl.BlockSpec((tb, d_pad), _row_idx),
        pl.BlockSpec((tb, p_pad), _row_idx),
    ] + [pl.BlockSpec((tb, c_pads[l]), _row_idx) for l in range(num_levels)]
    out_shape = [
        jax.ShapeDtypeStruct((b_pad, d_pad), jnp.float32),
        jax.ShapeDtypeStruct((b_pad, d_pad), jnp.float32),
        jax.ShapeDtypeStruct((b_pad, p_pad), jnp.float32),
    ] + [jax.ShapeDtypeStruct((b_pad, c_pads[l]), jnp.float32)
         for l in range(num_levels)]

    # Cost estimate + VMEM budget derived from actual tile footprints.
    flops = 2 * b_pad * (2 * k * d_pad + d_pad * p_pad)
    for l in range(num_levels):
        flops += 2 * b_pad * (d_pad * pc_pads[l] + pc_pads[l] * c_pads[l])
    weight_bytes = 4 * (2 * (k * d_pad + d_pad) + d_pad * p_pad + p_pad
                        + sum(d_pad * pcp + pcp + pcp * cp
                              for pcp, cp in zip(pc_pads, c_pads)))
    act_tile_bytes = 4 * tb * (k + 2 * d_pad + p_pad + sum(c_pads))
    io_bytes = 4 * b_pad * (k + 2 * d_pad + p_pad + sum(c_pads))
    window_bytes = 2 * (weight_bytes + act_tile_bytes)   # default 2x-buffered
    vmem_limit = int(min(_VMEM_CEIL, max(_VMEM_FLOOR, 2 * window_bytes)))

    outs = pl.pallas_call(
        kernel,
        grid=(nb,),
        in_specs=in_specs,
        out_specs=out_specs,
        out_shape=out_shape,
        compiler_params=pltpu.CompilerParams(
            dimension_semantics=("parallel",),
            vmem_limit_bytes=vmem_limit),
        cost_estimate=pl.CostEstimate(
            flops=int(flops),
            transcendentals=int(b_pad * (3 + num_levels)),
            bytes_accessed=int(weight_bytes + io_bytes)),
    )(*args)

    pe_pad, ce_pad, plog_pad = outs[0], outs[1], outs[2]
    child_pads = outs[3:]

    parent_logits = plog_pad[:b, :p]
    parent_proj_emb = pe_pad[:b, :d]
    child_proj_emb = ce_pad[:b, :d]
    child_logits = [cp[:b, :c] for cp, c in zip(child_pads, children)]
    return parent_logits, child_logits, parent_proj_emb, child_proj_emb


# ---------------------------------------------------------------------------
# Parameter init (torch trunc_normal_(std=2e-5) weights, stored (in, out))
# ---------------------------------------------------------------------------
def init_params(key, input_dim, proj_embed_dim, num_parents,
                num_children_per_parent, bias_scale=0.0):
    std = 2e-5

    def trunc_normal(k, shape):
        return jax.random.truncated_normal(k, -2.0, 2.0, shape, jnp.float32) * std

    n_lvl = len(num_children_per_parent)
    keys = jax.random.split(key, 6 + 2 * n_lvl)
    params = {
        "parent_proj_w": trunc_normal(keys[0], (input_dim, proj_embed_dim)),
        "parent_proj_b": jax.random.normal(keys[1],
                                           (1, proj_embed_dim)) * bias_scale,
        "child_proj_w": trunc_normal(keys[2], (input_dim, proj_embed_dim)),
        "child_proj_b": jax.random.normal(keys[3],
                                          (1, proj_embed_dim)) * bias_scale,
        "parent_cls_w": trunc_normal(keys[4], (proj_embed_dim, num_parents)),
        "parent_cls_b": jax.random.normal(keys[5],
                                          (1, num_parents)) * bias_scale,
        "child_cls_w": [],
        "child_cls_b": [],
    }
    for li, num_children in enumerate(num_children_per_parent):
        w = trunc_normal(keys[6 + li],
                         (num_parents, proj_embed_dim, num_children))
        b = jax.random.normal(keys[6 + n_lvl + li],
                              (num_parents, num_children)) * bias_scale
        params["child_cls_w"].append(w)
        params["child_cls_b"].append(b)
    return params


# ---------------------------------------------------------------------------
# Pure-JAX reference (mirrors the PyTorch module exactly) for verification
# ---------------------------------------------------------------------------
def reference_forward(x, params):
    def ln(v):
        m = jnp.mean(v, axis=-1, keepdims=True)
        var = jnp.mean(jnp.square(v - m), axis=-1, keepdims=True)
        return (v - m) / jnp.sqrt(var + LN_EPS)

    pe = ln(x @ params["parent_proj_w"] + params["parent_proj_b"])
    ce = ln(x @ params["child_proj_w"] + params["child_proj_b"])
    plog = ln(pe @ params["parent_cls_w"] + params["parent_cls_b"])
    pclass = jnp.argmax(jax.nn.softmax(plog, axis=1), axis=1)
    child_logits = []
    for w_stack, b_stack in zip(params["child_cls_w"], params["child_cls_b"]):
        w_sel = w_stack[pclass]          # (B, D, C)
        b_sel = b_stack[pclass]          # (B, C)
        child_logits.append(ln(jnp.einsum("bd,bdc->bc", ce, w_sel) + b_sel))
    return plog, child_logits, pe, ce


if __name__ == "__main__":
    B = 4
    input_dim = 32
    proj_embed_dim = 32
    num_parents = 8
    num_children_per_parent = [16, 8]

    key = jax.random.PRNGKey(0)
    kx, kp = jax.random.split(key)
    x = jax.random.normal(kx, (B, input_dim), jnp.float32)
    # Module inits biases to 0; use small random biases here to exercise the
    # bias-add path (trained params are arbitrary anyway).
    params = init_params(kp, input_dim, proj_embed_dim, num_parents,
                         num_children_per_parent, bias_scale=1e-2)

    arrays, meta = prepare_params(params)   # one-time weight preparation
    parent_logits, child_logits, parent_proj_emb, child_proj_emb = (
        je_hierarchical_classifier_forward(x, arrays, meta))
    jax.block_until_ready(
        (parent_logits, tuple(child_logits), parent_proj_emb, child_proj_emb))

    assert parent_logits.shape == (B, num_parents)
    assert parent_proj_emb.shape == (B, proj_embed_dim)
    assert child_proj_emb.shape == (B, proj_embed_dim)
    for cl, nc in zip(child_logits, num_children_per_parent):
        assert cl.shape == (B, nc)

    # Verify against the pure-JAX reference.
    r_plog, r_child, r_pe, r_ce = reference_forward(x, params)
    assert jnp.allclose(parent_proj_emb, r_pe, rtol=1e-4, atol=1e-4)
    assert jnp.allclose(child_proj_emb, r_ce, rtol=1e-4, atol=1e-4)
    assert jnp.allclose(parent_logits, r_plog, rtol=1e-4, atol=1e-4)
    for cl, rcl in zip(child_logits, r_child):
        assert jnp.allclose(cl, rcl, rtol=1e-4, atol=1e-4)

    print("KERNEL_OK")
</pallas_src>

<mosaic_0001>
module attributes {stable_mosaic.version = 11 : i64} {
  func.func @kernel(%arg0: i32, %arg1: memref<8x32xf32, #tpu.memory_space<vmem>>, %arg2: memref<32x128xf32, #tpu.memory_space<vmem>>, %arg3: memref<1x128xf32, #tpu.memory_space<vmem>>, %arg4: memref<32x128xf32, #tpu.memory_space<vmem>>, %arg5: memref<1x128xf32, #tpu.memory_space<vmem>>, %arg6: memref<128x128xf32, #tpu.memory_space<vmem>>, %arg7: memref<1x128xf32, #tpu.memory_space<vmem>>, %arg8: memref<128x128xf32, #tpu.memory_space<vmem>>, %arg9: memref<1x128xf32, #tpu.memory_space<vmem>>, %arg10: memref<128x128xf32, #tpu.memory_space<vmem>>, %arg11: memref<128x128xf32, #tpu.memory_space<vmem>>, %arg12: memref<1x128xf32, #tpu.memory_space<vmem>>, %arg13: memref<128x128xf32, #tpu.memory_space<vmem>>, %arg14: memref<8x128xf32, #tpu.memory_space<vmem>>, %arg15: memref<8x128xf32, #tpu.memory_space<vmem>>, %arg16: memref<8x128xf32, #tpu.memory_space<vmem>>, %arg17: memref<8x128xf32, #tpu.memory_space<vmem>>, %arg18: memref<8x128xf32, #tpu.memory_space<vmem>>) attributes {dimension_semantics = [#tpu.dimension_semantics<parallel>], iteration_bounds = array<i64: 1>, scalar_prefetch = 0 : i64, scratch_operands = 0 : i64, tpu.core_type = #tpu.core_type<tc>, window_params = [{transform_indices = @transform_0, window_bounds = array<i64: 8, 32>}, {pipeline_mode = #tpu.pipeline_mode<synchronous>, transform_indices = @transform_1, window_bounds = array<i64: 32, 128>}, {pipeline_mode = #tpu.pipeline_mode<synchronous>, transform_indices = @transform_2, window_bounds = array<i64: 1, 128>}, {pipeline_mode = #tpu.pipeline_mode<synchronous>, transform_indices = @transform_3, window_bounds = array<i64: 32, 128>}, {pipeline_mode = #tpu.pipeline_mode<synchronous>, transform_indices = @transform_4, window_bounds = array<i64: 1, 128>}, {pipeline_mode = #tpu.pipeline_mode<synchronous>, transform_indices = @transform_5, window_bounds = array<i64: 128, 128>}, {pipeline_mode = #tpu.pipeline_mode<synchronous>, transform_indices = @transform_6, window_bounds = array<i64: 1, 128>}, {pipeline_mode = #tpu.pipeline_mode<synchronous>, transform_indices = @transform_7, window_bounds = array<i64: 128, 128>}, {pipeline_mode = #tpu.pipeline_mode<synchronous>, transform_indices = @transform_8, window_bounds = array<i64: 1, 128>}, {pipeline_mode = #tpu.pipeline_mode<synchronous>, transform_indices = @transform_9, window_bounds = array<i64: 128, 128>}, {pipeline_mode = #tpu.pipeline_mode<synchronous>, transform_indices = @transform_10, window_bounds = array<i64: 128, 128>}, {pipeline_mode = #tpu.pipeline_mode<synchronous>, transform_indices = @transform_11, window_bounds = array<i64: 1, 128>}, {pipeline_mode = #tpu.pipeline_mode<synchronous>, transform_indices = @transform_12, window_bounds = array<i64: 128, 128>}, {transform_indices = @transform_13, window_bounds = array<i64: 8, 128>}, {transform_indices = @transform_14, window_bounds = array<i64: 8, 128>}, {transform_indices = @transform_15, window_bounds = array<i64: 8, 128>}, {transform_indices = @transform_16, window_bounds = array<i64: 8, 128>}, {transform_indices = @transform_17, window_bounds = array<i64: 8, 128>}]} {
    %c0 = arith.constant 0 : index
    %c0_0 = arith.constant 0 : index
    %0 = vector.load %arg1[%c0, %c0_0] : memref<8x32xf32, #tpu.memory_space<vmem>>, vector<8x32xf32>
    %c0_1 = arith.constant 0 : index
    %c0_2 = arith.constant 0 : index
    %1 = vector.load %arg2[%c0_1, %c0_2] : memref<32x128xf32, #tpu.memory_space<vmem>>, vector<32x128xf32>
    %cst = arith.constant dense<0.000000e+00> : vector<8x128xf32>
    %2 = tpu.matmul %0, %1, %cst {dimension_numbers = #tpu.dot_dimension_numbers<[1], [0], [0], [1], [0, 0, 1, 1], [], []>} : vector<8x32xf32>, vector<32x128xf32>, vector<8x128xf32> -> vector<8x128xf32>
    %c0_3 = arith.constant 0 : index
    %c0_4 = arith.constant 0 : index
    %3 = vector.load %arg3[%c0_3, %c0_4] : memref<1x128xf32, #tpu.memory_space<vmem>>, vector<1x128xf32>
    %4 = vector.broadcast %3 : vector<1x128xf32> to vector<8x128xf32>
    %5 = arith.addf %2, %4 : vector<8x128xf32>
    %cst_5 = arith.constant dense<0.000000e+00> : vector<8xf32>
    %6 = vector.multi_reduction <add>, %5, %cst_5 [1] : vector<8x128xf32> to vector<8xf32>
    %7 = vector.shape_cast %6 : vector<8xf32> to vector<8x1xf32>
    %cst_6 = arith.constant 3.125000e-02 : f32
    %8 = vector.broadcast %cst_6 : f32 to vector<8x1xf32>
    %9 = arith.mulf %7, %8 : vector<8x1xf32>
    %10 = vector.broadcast %9 : vector<8x1xf32> to vector<8x128xf32>
    %11 = arith.subf %5, %10 : vector<8x128xf32>
    %12 = arith.mulf %11, %11 : vector<8x128xf32>
    %cst_7 = arith.constant dense<0.000000e+00> : vector<8xf32>
    %13 = vector.multi_reduction <add>, %12, %cst_7 [1] : vector<8x128xf32> to vector<8xf32>
    %14 = vector.shape_cast %13 : vector<8xf32> to vector<8x1xf32>
    %cst_8 = arith.constant 9.600000e+01 : f32
    %15 = vector.broadcast %cst_8 : f32 to vector<8x1xf32>
    %16 = arith.mulf %15, %9 : vector<8x1xf32>
    %17 = arith.mulf %16, %9 : vector<8x1xf32>
    %18 = arith.subf %14, %17 : vector<8x1xf32>
    %cst_9 = arith.constant 3.125000e-02 : f32
    %19 = vector.broadcast %cst_9 : f32 to vector<8x1xf32>
    %20 = arith.mulf %18, %19 : vector<8x1xf32>
    %cst_10 = arith.constant 9.99999974E-6 : f32
    %21 = vector.broadcast %cst_10 : f32 to vector<8x1xf32>
    %22 = arith.addf %20, %21 : vector<8x1xf32>
    %23 = math.rsqrt %22 : vector<8x1xf32>
    %24 = vector.broadcast %23 : vector<8x1xf32> to vector<8x128xf32>
    %25 = arith.mulf %11, %24 : vector<8x128xf32>
    %c0_11 = arith.constant 0 : index
    %c0_12 = arith.constant 0 : index
    %26 = vector.load %arg4[%c0_11, %c0_12] : memref<32x128xf32, #tpu.memory_space<vmem>>, vector<32x128xf32>
    %cst_13 = arith.constant dense<0.000000e+00> : vector<8x128xf32>
    %27 = tpu.matmul %0, %26, %cst_13 {dimension_numbers = #tpu.dot_dimension_numbers<[1], [0], [0], [1], [0, 0, 1, 1], [], []>} : vector<8x32xf32>, vector<32x128xf32>, vector<8x128xf32> -> vector<8x128xf32>
    %c0_14 = arith.constant 0 : index
    %c0_15 = arith.constant 0 : index
    %28 = vector.load %arg5[%c0_14, %c0_15] : memref<1x128xf32, #tpu.memory_space<vmem>>, vector<1x128xf32>
    %29 = vector.broadcast %28 : vector<1x128xf32> to vector<8x128xf32>
    %30 = arith.addf %27, %29 : vector<8x128xf32>
    %cst_16 = arith.constant dense<0.000000e+00> : vector<8xf32>
    %31 = vector.multi_reduction <add>, %30, %cst_16 [1] : vector<8x128xf32> to vector<8xf32>
    %32 = vector.shape_cast %31 : vector<8xf32> to vector<8x1xf32>
    %cst_17 = arith.constant 3.125000e-02 : f32
    %33 = vector.broadcast %cst_17 : f32 to vector<8x1xf32>
    %34 = arith.mulf %32, %33 : vector<8x1xf32>
    %35 = vector.broadcast %34 : vector<8x1xf32> to vector<8x128xf32>
    %36 = arith.subf %30, %35 : vector<8x128xf32>
    %37 = arith.mulf %36, %36 : vector<8x128xf32>
    %cst_18 = arith.constant dense<0.000000e+00> : vector<8xf32>
    %38 = vector.multi_reduction <add>, %37, %cst_18 [1] : vector<8x128xf32> to vector<8xf32>
    %39 = vector.shape_cast %38 : vector<8xf32> to vector<8x1xf32>
    %cst_19 = arith.constant 9.600000e+01 : f32
    %40 = vector.broadcast %cst_19 : f32 to vector<8x1xf32>
    %41 = arith.mulf %40, %34 : vector<8x1xf32>
    %42 = arith.mulf %41, %34 : vector<8x1xf32>
    %43 = arith.subf %39, %42 : vector<8x1xf32>
    %cst_20 = arith.constant 3.125000e-02 : f32
    %44 = vector.broadcast %cst_20 : f32 to vector<8x1xf32>
    %45 = arith.mulf %43, %44 : vector<8x1xf32>
    %cst_21 = arith.constant 9.99999974E-6 : f32
    %46 = vector.broadcast %cst_21 : f32 to vector<8x1xf32>
    %47 = arith.addf %45, %46 : vector<8x1xf32>
    %48 = math.rsqrt %47 : vector<8x1xf32>
    %49 = vector.broadcast %48 : vector<8x1xf32> to vector<8x128xf32>
    %50 = arith.mulf %36, %49 : vector<8x128xf32>
    %c0_22 = arith.constant 0 : index
    %c0_23 = arith.constant 0 : index
    %51 = vector.load %arg6[%c0_22, %c0_23] : memref<128x128xf32, #tpu.memory_space<vmem>>, vector<128x128xf32>
    %cst_24 = arith.constant dense<0.000000e+00> : vector<8x128xf32>
    %52 = tpu.matmul %25, %51, %cst_24 {dimension_numbers = #tpu.dot_dimension_numbers<[1], [0], [0], [1], [0, 0, 1, 1], [], []>} : vector<8x128xf32>, vector<128x128xf32>, vector<8x128xf32> -> vector<8x128xf32>
    %c0_25 = arith.constant 0 : index
    %c0_26 = arith.constant 0 : index
    %53 = vector.load %arg7[%c0_25, %c0_26] : memref<1x128xf32, #tpu.memory_space<vmem>>, vector<1x128xf32>
    %54 = vector.broadcast %53 : vector<1x128xf32> to vector<8x128xf32>
    %55 = arith.addf %52, %54 : vector<8x128xf32>
    %cst_27 = arith.constant dense<0.000000e+00> : vector<8xf32>
    %56 = vector.multi_reduction <add>, %55, %cst_27 [1] : vector<8x128xf32> to vector<8xf32>
    %57 = vector.shape_cast %56 : vector<8xf32> to vector<8x1xf32>
    %cst_28 = arith.constant 1.250000e-01 : f32
    %58 = vector.broadcast %cst_28 : f32 to vector<8x1xf32>
    %59 = arith.mulf %57, %58 : vector<8x1xf32>
    %60 = vector.broadcast %59 : vector<8x1xf32> to vector<8x128xf32>
    %61 = arith.subf %55, %60 : vector<8x128xf32>
    %62 = arith.mulf %61, %61 : vector<8x128xf32>
    %cst_29 = arith.constant dense<0.000000e+00> : vector<8xf32>
    %63 = vector.multi_reduction <add>, %62, %cst_29 [1] : vector<8x128xf32> to vector<8xf32>
    %64 = vector.shape_cast %63 : vector<8xf32> to vector<8x1xf32>
    %cst_30 = arith.constant 1.200000e+02 : f32
    %65 = vector.broadcast %cst_30 : f32 to vector<8x1xf32>
    %66 = arith.mulf %65, %59 : vector<8x1xf32>
    %67 = arith.mulf %66, %59 : vector<8x1xf32>
    %68 = arith.subf %64, %67 : vector<8x1xf32>
    %cst_31 = arith.constant 1.250000e-01 : f32
    %69 = vector.broadcast %cst_31 : f32 to vector<8x1xf32>
    %70 = arith.mulf %68, %69 : vector<8x1xf32>
    %cst_32 = arith.constant 9.99999974E-6 : f32
    %71 = vector.broadcast %cst_32 : f32 to vector<8x1xf32>
    %72 = arith.addf %70, %71 : vector<8x1xf32>
    %73 = math.rsqrt %72 : vector<8x1xf32>
    %74 = vector.broadcast %73 : vector<8x1xf32> to vector<8x128xf32>
    %75 = arith.mulf %61, %74 : vector<8x128xf32>
    %c0_33 = arith.constant 0 : index
    %c0_34 = arith.constant 0 : index
    %76 = vector.load %arg14[%c0_33, %c0_34] : memref<8x128xf32, #tpu.memory_space<vmem>>, vector<8x128xf32>
    tpu.vector_store %arg14[%c0_33, %c0_34], %25 {strides = array<i32>} : memref<8x128xf32, #tpu.memory_space<vmem>>, vector<8x128xf32>,
    %c0_35 = arith.constant 0 : index
    %c0_36 = arith.constant 0 : index
    %77 = vector.load %arg15[%c0_35, %c0_36] : memref<8x128xf32, #tpu.memory_space<vmem>>, vector<8x128xf32>
    tpu.vector_store %arg15[%c0_35, %c0_36], %50 {strides = array<i32>} : memref<8x128xf32, #tpu.memory_space<vmem>>, vector<8x128xf32>,
    %c0_37 = arith.constant 0 : index
    %c0_38 = arith.constant 0 : index
    %78 = vector.load %arg16[%c0_37, %c0_38] : memref<8x128xf32, #tpu.memory_space<vmem>>, vector<8x128xf32>
    tpu.vector_store %arg16[%c0_37, %c0_38], %75 {strides = array<i32>} : memref<8x128xf32, #tpu.memory_space<vmem>>, vector<8x128xf32>,
    %79 = tpu.iota {dimensions = array<i32: 1>} : vector<8x128xi32>
    %c8_i32 = arith.constant 8 : i32
    %80 = vector.broadcast %c8_i32 : i32 to vector<8x128xi32>
    %81 = arith.cmpi slt, %79, %80 : vector<8x128xi32>
    %cst_39 = arith.constant -1.000000e+30 : f32
    %82 = vector.broadcast %cst_39 : f32 to vector<8x128xf32>
    %83 = arith.select %81, %75, %82 : vector<8x128xi1>, vector<8x128xf32>
    %cst_40 = arith.constant dense<0xFF800000> : vector<8xf32>
    %84 = vector.multi_reduction <maximumf>, %83, %cst_40 [1] : vector<8x128xf32> to vector<8xf32>
    %85 = vector.shape_cast %84 : vector<8xf32> to vector<8x1xf32>
    %86 = vector.broadcast %85 : vector<8x1xf32> to vector<8x128xf32>
    %87 = arith.cmpf oge, %83, %86 : vector<8x128xf32>
    %88 = arith.sitofp %79 : vector<8x128xi32> to vector<8x128xf32>
    %cst_41 = arith.constant 1.280000e+02 : f32
    %89 = vector.broadcast %cst_41 : f32 to vector<8x128xf32>
    %90 = arith.select %87, %88, %89 : vector<8x128xi1>, vector<8x128xf32>
    %cst_42 = arith.constant dense<0x7F800000> : vector<8xf32>
    %91 = vector.multi_reduction <minimumf>, %90, %cst_42 [1] : vector<8x128xf32> to vector<8xf32>
    %92 = vector.shape_cast %91 : vector<8xf32> to vector<8x1xf32>
    %93 = arith.fptosi %92 : vector<8x1xf32> to vector<8x1xi32>
    %c0_43 = arith.constant 0 : index
    %c0_44 = arith.constant 0 : index
    %94 = vector.load %arg8[%c0_43, %c0_44] : memref<128x128xf32, #tpu.memory_space<vmem>>, vector<128x128xf32>
    %cst_45 = arith.constant dense<0.000000e+00> : vector<8x128xf32>
    %95 = tpu.matmul %50, %94, %cst_45 {dimension_numbers = #tpu.dot_dimension_numbers<[1], [0], [0], [1], [0, 0, 1, 1], [], []>} : vector<8x128xf32>, vector<128x128xf32>, vector<8x128xf32> -> vector<8x128xf32>
    %c0_46 = arith.constant 0 : index
    %c0_47 = arith.constant 0 : index
    %96 = vector.load %arg9[%c0_46, %c0_47] : memref<1x128xf32, #tpu.memory_space<vmem>>, vector<1x128xf32>
    %97 = vector.broadcast %96 : vector<1x128xf32> to vector<8x128xf32>
    %98 = arith.addf %95, %97 : vector<8x128xf32>
    %99 = tpu.iota {dimensions = array<i32: 1>} : vector<8x128xi32>
    %c16_i32 = arith.constant 16 : i32
    %100 = vector.broadcast %c16_i32 : i32 to vector<8x1xi32>
    %101 = arith.muli %93, %100 : vector<8x1xi32>
    %102 = vector.broadcast %101 : vector<8x1xi32> to vector<8x128xi32>
    %103 = arith.cmpi sge, %99, %102 : vector<8x128xi32>
    %c16_i32_48 = arith.constant 16 : i32
    %104 = vector.broadcast %c16_i32_48 : i32 to vector<8x1xi32>
    %105 = arith.addi %101, %104 : vector<8x1xi32>
    %106 = vector.broadcast %105 : vector<8x1xi32> to vector<8x128xi32>
    %107 = arith.cmpi slt, %99, %106 : vector<8x128xi32>
    %108 = arith.andi %103, %107 : vector<8x128xi1>
    %cst_49 = arith.constant 0.000000e+00 : f32
    %109 = vector.broadcast %cst_49 : f32 to vector<8x128xf32>
    %110 = arith.select %108, %98, %109 : vector<8x128xi1>, vector<8x128xf32>
    %c0_50 = arith.constant 0 : index
    %c0_51 = arith.constant 0 : index
    %111 = vector.load %arg10[%c0_50, %c0_51] : memref<128x128xf32, #tpu.memory_space<vmem>>, vector<128x128xf32>
    %cst_52 = arith.constant dense<0.000000e+00> : vector<8x128xf32>
    %112 = tpu.matmul %110, %111, %cst_52 {dimension_numbers = #tpu.dot_dimension_numbers<[1], [0], [0], [1], [0, 0, 1, 1], [], []>} : vector<8x128xf32>, vector<128x128xf32>, vector<8x128xf32> -> vector<8x128xf32>
    %cst_53 = arith.constant dense<0.000000e+00> : vector<8xf32>
    %113 = vector.multi_reduction <add>, %112, %cst_53 [1] : vector<8x128xf32> to vector<8xf32>
    %114 = vector.shape_cast %113 : vector<8xf32> to vector<8x1xf32>
    %cst_54 = arith.constant 6.250000e-02 : f32
    %115 = vector.broadcast %cst_54 : f32 to vector<8x1xf32>
    %116 = arith.mulf %114, %115 : vector<8x1xf32>
    %117 = vector.broadcast %116 : vector<8x1xf32> to vector<8x128xf32>
    %118 = arith.subf %112, %117 : vector<8x128xf32>
    %119 = arith.mulf %118, %118 : vector<8x128xf32>
    %cst_55 = arith.constant dense<0.000000e+00> : vector<8xf32>
    %120 = vector.multi_reduction <add>, %119, %cst_55 [1] : vector<8x128xf32> to vector<8xf32>
    %121 = vector.shape_cast %120 : vector<8xf32> to vector<8x1xf32>
    %cst_56 = arith.constant 1.120000e+02 : f32
    %122 = vector.broadcast %cst_56 : f32 to vector<8x1xf32>
    %123 = arith.mulf %122, %116 : vector<8x1xf32>
    %124 = arith.mulf %123, %116 : vector<8x1xf32>
    %125 = arith.subf %121, %124 : vector<8x1xf32>
    %cst_57 = arith.constant 6.250000e-02 : f32
    %126 = vector.broadcast %cst_57 : f32 to vector<8x1xf32>
    %127 = arith.mulf %125, %126 : vector<8x1xf32>
    %cst_58 = arith.constant 9.99999974E-6 : f32
    %128 = vector.broadcast %cst_58 : f32 to vector<8x1xf32>
    %129 = arith.addf %127, %128 : vector<8x1xf32>
    %130 = math.rsqrt %129 : vector<8x1xf32>
    %131 = vector.broadcast %130 : vector<8x1xf32> to vector<8x128xf32>
    %132 = arith.mulf %118, %131 : vector<8x128xf32>
    %c0_59 = arith.constant 0 : index
    %c0_60 = arith.constant 0 : index
    %133 = vector.load %arg17[%c0_59, %c0_60] : memref<8x128xf32, #tpu.memory_space<vmem>>, vector<8x128xf32>
    tpu.vector_store %arg17[%c0_59, %c0_60], %132 {strides = array<i32>} : memref<8x128xf32, #tpu.memory_space<vmem>>, vector<8x128xf32>,
    %c0_61 = arith.constant 0 : index
    %c0_62 = arith.constant 0 : index
    %134 = vector.load %arg11[%c0_61, %c0_62] : memref<128x128xf32, #tpu.memory_space<vmem>>, vector<128x128xf32>
    %cst_63 = arith.constant dense<0.000000e+00> : vector<8x128xf32>
    %135 = tpu.matmul %50, %134, %cst_63 {dimension_numbers = #tpu.dot_dimension_numbers<[1], [0], [0], [1], [0, 0, 1, 1], [], []>} : vector<8x128xf32>, vector<128x128xf32>, vector<8x128xf32> -> vector<8x128xf32>
    %c0_64 = arith.constant 0 : index
    %c0_65 = arith.constant 0 : index
    %136 = vector.load %arg12[%c0_64, %c0_65] : memref<1x128xf32, #tpu.memory_space<vmem>>, vector<1x128xf32>
    %137 = vector.broadcast %136 : vector<1x128xf32> to vector<8x128xf32>
    %138 = arith.addf %135, %137 : vector<8x128xf32>
    %139 = tpu.iota {dimensions = array<i32: 1>} : vector<8x128xi32>
    %c8_i32_66 = arith.constant 8 : i32
    %140 = vector.broadcast %c8_i32_66 : i32 to vector<8x1xi32>
    %141 = arith.muli %93, %140 : vector<8x1xi32>
    %142 = vector.broadcast %141 : vector<8x1xi32> to vector<8x128xi32>
    %143 = arith.cmpi sge, %139, %142 : vector<8x128xi32>
    %c8_i32_67 = arith.constant 8 : i32
    %144 = vector.broadcast %c8_i32_67 : i32 to vector<8x1xi32>
    %145 = arith.addi %141, %144 : vector<8x1xi32>
    %146 = vector.broadcast %145 : vector<8x1xi32> to vector<8x128xi32>
    %147 = arith.cmpi slt, %139, %146 : vector<8x128xi32>
    %148 = arith.andi %143, %147 : vector<8x128xi1>
    %cst_68 = arith.constant 0.000000e+00 : f32
    %149 = vector.broadcast %cst_68 : f32 to vector<8x128xf32>
    %150 = arith.select %148, %138, %149 : vector<8x128xi1>, vector<8x128xf32>
    %c0_69 = arith.constant 0 : index
    %c0_70 = arith.constant 0 : index
    %151 = vector.load %arg13[%c0_69, %c0_70] : memref<128x128xf32, #tpu.memory_space<vmem>>, vector<128x128xf32>
    %cst_71 = arith.constant dense<0.000000e+00> : vector<8x128xf32>
    %152 = tpu.matmul %150, %151, %cst_71 {dimension_numbers = #tpu.dot_dimension_numbers<[1], [0], [0], [1], [0, 0, 1, 1], [], []>} : vector<8x128xf32>, vector<128x128xf32>, vector<8x128xf32> -> vector<8x128xf32>
    %cst_72 = arith.constant dense<0.000000e+00> : vector<8xf32>
    %153 = vector.multi_reduction <add>, %152, %cst_72 [1] : vector<8x128xf32> to vector<8xf32>
    %154 = vector.shape_cast %153 : vector<8xf32> to vector<8x1xf32>
    %cst_73 = arith.constant 1.250000e-01 : f32
    %155 = vector.broadcast %cst_73 : f32 to vector<8x1xf32>
    %156 = arith.mulf %154, %155 : vector<8x1xf32>
    %157 = vector.broadcast %156 : vector<8x1xf32> to vector<8x128xf32>
    %158 = arith.subf %152, %157 : vector<8x128xf32>
    %159 = arith.mulf %158, %158 : vector<8x128xf32>
    %cst_74 = arith.constant dense<0.000000e+00> : vector<8xf32>
    %160 = vector.multi_reduction <add>, %159, %cst_74 [1] : vector<8x128xf32> to vector<8xf32>
    %161 = vector.shape_cast %160 : vector<8xf32> to vector<8x1xf32>
    %cst_75 = arith.constant 1.200000e+02 : f32
    %162 = vector.broadcast %cst_75 : f32 to vector<8x1xf32>
    %163 = arith.mulf %162, %156 : vector<8x1xf32>
    %164 = arith.mulf %163, %156 : vector<8x1xf32>
    %165 = arith.subf %161, %164 : vector<8x1xf32>
    %cst_76 = arith.constant 1.250000e-01 : f32
    %166 = vector.broadcast %cst_76 : f32 to vector<8x1xf32>
    %167 = arith.mulf %165, %166 : vector<8x1xf32>
    %cst_77 = arith.constant 9.99999974E-6 : f32
    %168 = vector.broadcast %cst_77 : f32 to vector<8x1xf32>
    %169 = arith.addf %167, %168 : vector<8x1xf32>
    %170 = math.rsqrt %169 : vector<8x1xf32>
    %171 = vector.broadcast %170 : vector<8x1xf32> to vector<8x128xf32>
    %172 = arith.mulf %158, %171 : vector<8x128xf32>
    %c0_78 = arith.constant 0 : index
    %c0_79 = arith.constant 0 : index
    %173 = vector.load %arg18[%c0_78, %c0_79] : memref<8x128xf32, #tpu.memory_space<vmem>>, vector<8x128xf32>
    tpu.vector_store %arg18[%c0_78, %c0_79], %172 {strides = array<i32>} : memref<8x128xf32, #tpu.memory_space<vmem>>, vector<8x128xf32>,
    return
  }
  func.func @transform_0(%arg0: i32) -> (i32, i32) {
    %c0_i32 = arith.constant 0 : i32
    %c0_i32_0 = arith.constant 0 : i32
    return %arg0, %c0_i32 : i32, i32
  }
  func.func @transform_1(%arg0: i32) -> (i32, i32) {
    %c0_i32 = arith.constant 0 : i32
    %c0_i32_0 = arith.constant 0 : i32
    %c0_i32_1 = arith.constant 0 : i32
    return %c0_i32, %c0_i32_0 : i32, i32
  }
  func.func @transform_2(%arg0: i32) -> (i32, i32) {
    %c0_i32 = arith.constant 0 : i32
    %c0_i32_0 = arith.constant 0 : i32
    %c0_i32_1 = arith.constant 0 : i32
    return %c0_i32, %c0_i32_0 : i32, i32
  }
  func.func @transform_3(%arg0: i32) -> (i32, i32) {
    %c0_i32 = arith.constant 0 : i32
    %c0_i32_0 = arith.constant 0 : i32
    %c0_i32_1 = arith.constant 0 : i32
    return %c0_i32, %c0_i32_0 : i32, i32
  }
  func.func @transform_4(%arg0: i32) -> (i32, i32) {
    %c0_i32 = arith.constant 0 : i32
    %c0_i32_0 = arith.constant 0 : i32
    %c0_i32_1 = arith.constant 0 : i32
    return %c0_i32, %c0_i32_0 : i32, i32
  }
  func.func @transform_5(%arg0: i32) -> (i32, i32) {
    %c0_i32 = arith.constant 0 : i32
    %c0_i32_0 = arith.constant 0 : i32
    %c0_i32_1 = arith.constant 0 : i32
    return %c0_i32, %c0_i32_0 : i32, i32
  }
  func.func @transform_6(%arg0: i32) -> (i32, i32) {
    %c0_i32 = arith.constant 0 : i32
    %c0_i32_0 = arith.constant 0 : i32
    %c0_i32_1 = arith.constant 0 : i32
    return %c0_i32, %c0_i32_0 : i32, i32
  }
  func.func @transform_7(%arg0: i32) -> (i32, i32) {
    %c0_i32 = arith.constant 0 : i32
    %c0_i32_0 = arith.constant 0 : i32
    %c0_i32_1 = arith.constant 0 : i32
    return %c0_i32, %c0_i32_0 : i32, i32
  }
  func.func @transform_8(%arg0: i32) -> (i32, i32) {
    %c0_i32 = arith.constant 0 : i32
    %c0_i32_0 = arith.constant 0 : i32
    %c0_i32_1 = arith.constant 0 : i32
    return %c0_i32, %c0_i32_0 : i32, i32
  }
  func.func @transform_9(%arg0: i32) -> (i32, i32) {
    %c0_i32 = arith.constant 0 : i32
    %c0_i32_0 = arith.constant 0 : i32
    %c0_i32_1 = arith.constant 0 : i32
    return %c0_i32, %c0_i32_0 : i32, i32
  }
  func.func @transform_10(%arg0: i32) -> (i32, i32) {
    %c0_i32 = arith.constant 0 : i32
    %c0_i32_0 = arith.constant 0 : i32
    %c0_i32_1 = arith.constant 0 : i32
    return %c0_i32, %c0_i32_0 : i32, i32
  }
  func.func @transform_11(%arg0: i32) -> (i32, i32) {
    %c0_i32 = arith.constant 0 : i32
    %c0_i32_0 = arith.constant 0 : i32
    %c0_i32_1 = arith.constant 0 : i32
    return %c0_i32, %c0_i32_0 : i32, i32
  }
  func.func @transform_12(%arg0: i32) -> (i32, i32) {
    %c0_i32 = arith.constant 0 : i32
    %c0_i32_0 = arith.constant 0 : i32
    %c0_i32_1 = arith.constant 0 : i32
    return %c0_i32, %c0_i32_0 : i32, i32
  }
  func.func @transform_13(%arg0: i32) -> (i32, i32) {
    %c0_i32 = arith.constant 0 : i32
    %c0_i32_0 = arith.constant 0 : i32
    return %arg0, %c0_i32 : i32, i32
  }
  func.func @transform_14(%arg0: i32) -> (i32, i32) {
    %c0_i32 = arith.constant 0 : i32
    %c0_i32_0 = arith.constant 0 : i32
    return %arg0, %c0_i32 : i32, i32
  }
  func.func @transform_15(%arg0: i32) -> (i32, i32) {
    %c0_i32 = arith.constant 0 : i32
    %c0_i32_0 = arith.constant 0 : i32
    return %arg0, %c0_i32 : i32, i32
  }
  func.func @transform_16(%arg0: i32) -> (i32, i32) {
    %c0_i32 = arith.constant 0 : i32
    %c0_i32_0 = arith.constant 0 : i32
    return %arg0, %c0_i32 : i32, i32
  }
  func.func @transform_17(%arg0: i32) -> (i32, i32) {
    %c0_i32 = arith.constant 0 : i32
    %c0_i32_0 = arith.constant 0 : i32
    return %arg0, %c0_i32 : i32, i32
  }
}

</mosaic_0001>

<llo_original>
// kernel: tpu_custom_call.1
$region0: #{tpu_custom_call.1}
  #allocation0 [shape = 'u32[]', space=smem, size = 0x4, offset = 0x4, fixed_abs, tag = 'smem constant byte address 0x4 - core index']
  #allocation1 [shape = 'u32[144,128]{1,0:T(1,128)}', space=vmem, size = 0x12000, scoped, tag = 'internal scratch']
  %s0 = inlined_call_operand.hbm [shape: f32[8,32], index: 0, kind: input, shape index: {}]
  %s1 = inlined_call_operand.hbm [shape: f32[32,128], index: 1, kind: input, shape index: {}]
  %s2 = inlined_call_operand.vmem [shape: f32[1,128], index: 2, kind: input, shape index: {}]
  %s3 = inlined_call_operand.hbm [shape: f32[32,128], index: 3, kind: input, shape index: {}]
  %s4 = inlined_call_operand.vmem [shape: f32[1,128], index: 4, kind: input, shape index: {}]
  %s5 = inlined_call_operand.hbm [shape: f32[128,128], index: 5, kind: input, shape index: {}]
  %s6 = inlined_call_operand.vmem [shape: f32[1,128], index: 6, kind: input, shape index: {}]
  %s7 = inlined_call_operand.hbm [shape: f32[128,128], index: 7, kind: input, shape index: {}]
  %s8 = inlined_call_operand.vmem [shape: f32[1,128], index: 8, kind: input, shape index: {}]
  %s9 = inlined_call_operand.hbm [shape: f32[128,128], index: 9, kind: input, shape index: {}]
  %s10 = inlined_call_operand.hbm [shape: f32[128,128], index: 10, kind: input, shape index: {}]
  %s11 = inlined_call_operand.vmem [shape: f32[1,128], index: 11, kind: input, shape index: {}]
  %s12 = inlined_call_operand.hbm [shape: f32[128,128], index: 12, kind: input, shape index: {}]
  %s13 = inlined_call_operand.hbm [shape: f32[8,128], index: 13, kind: output, shape index: {0}]
  %s14 = inlined_call_operand.hbm [shape: f32[8,128], index: 14, kind: output, shape index: {1}]
  %s15 = inlined_call_operand.hbm [shape: f32[8,128], index: 15, kind: output, shape index: {2}]
  %s16 = inlined_call_operand.hbm [shape: f32[8,128], index: 16, kind: output, shape index: {3}]
  %s17 = inlined_call_operand.hbm [shape: f32[8,128], index: 17, kind: output, shape index: {4}]
  %18 = xla_tuple %s13, %s14, %s15, %s16, %s17
  %s19 = sld [smem:[#allocation0]]
  $region126: #{tpu_custom_call.1} parent=0
    _
  %s21 = ssub.s32 1, %s19
  %s22 = scalar_select 0, %s21, %s19
  $region1: #{tpu_custom_call.1} parent=0
    #allocation2 [shape = 'u8[4096]{0}', space=vmem, size = 0x1000, scoped, tag = 'input window, operand 0, single buffered']
    #allocation3 [shape = 's32[1]{0}', space=sflag, size = 0x4, scoped, tag = 'scoped memory for tpu_custom_call.1']
    #allocation4 [shape = 's32[1]{0}', space=sflag, size = 0x4, scoped, tag = 'scoped memory for tpu_custom_call.1']
    #allocation5 [shape = 'u8[16384]{0}', space=vmem, size = 0x4000, scoped, tag = 'input window, operand 1, single buffered']
    #allocation6 [shape = 's32[1]{0}', space=sflag, size = 0x4, scoped, tag = 'scoped memory for tpu_custom_call.1']
    #allocation7 [shape = 'u8[16384]{0}', space=vmem, size = 0x4000, scoped, tag = 'input window, operand 3, single buffered']
    #allocation8 [shape = 'u8[65536]{0}', space=vmem, size = 0x10000, scoped, tag = 'input window, operand 5, single buffered']
    #allocation9 [shape = 's32[1]{0}', space=sflag, size = 0x4, scoped, tag = 'scoped memory for tpu_custom_call.1']
    #allocation10 [shape = 'u8[65536]{0}', space=vmem, size = 0x10000, scoped, tag = 'input window, operand 7, single buffered']
    #allocation11 [shape = 'u8[65536]{0}', space=vmem, size = 0x10000, scoped, tag = 'input window, operand 9, single buffered']
    #allocation12 [shape = 's32[1]{0}', space=sflag, size = 0x4, scoped, tag = 'scoped memory for tpu_custom_call.1']
    #allocation13 [shape = 'u8[65536]{0}', space=vmem, size = 0x10000, scoped, tag = 'input window, operand 10, single buffered']
    #allocation14 [shape = 'u8[65536]{0}', space=vmem, size = 0x10000, scoped, tag = 'input window, operand 12, single buffered']
    #allocation15 [shape = 's32[1]{0}', space=sflag, size = 0x4, scoped, tag = 'scoped memory for tpu_custom_call.1']
    #allocation16 [shape = 'u8[4096]{0}', space=vmem, size = 0x1000, scoped, tag = 'output window, operand 0, single buffered']
    #allocation17 [shape = 'u8[4096]{0}', space=vmem, size = 0x1000, scoped, tag = 'output window, operand 1, single buffered']
    #allocation18 [shape = 's32[1]{0}', space=sflag, size = 0x4, scoped, tag = 'scoped memory for tpu_custom_call.1']
    #allocation19 [shape = 'u8[4096]{0}', space=vmem, size = 0x1000, scoped, tag = 'output window, operand 2, single buffered']
    #allocation20 [shape = 'u8[4096]{0}', space=vmem, size = 0x1000, scoped, tag = 'output window, operand 3, single buffered']
    #allocation21 [shape = 's32[1]{0}', space=sflag, size = 0x4, scoped, tag = 'scoped memory for tpu_custom_call.1']
    #allocation22 [shape = 'u8[4096]{0}', space=vmem, size = 0x1000, scoped, tag = 'output window, operand 4, single buffered']
    %23 = vsyncpa [#allocation3], 0
    %24 = vsyncpa [#allocation6], 0
    %25 = vsyncpa [#allocation9], 0
    %26 = vsyncpa [#allocation12], 0
    %27 = vsyncpa [#allocation15], 0
    %28 = vsyncpa [#allocation4], 0
    %29 = vsyncpa [#allocation18], 0
    %30 = vsyncpa [#allocation21], 0
    // Predicated region
    $region2: #{tpu_custom_call.1} parent=1 // pred_check
      _
    $region3: #{tpu_custom_call.1} parent=1 // pred_check_branch
      %32 = sbr.rel (0) target = $region5
    $region4: #{tpu_custom_call.1} parent=1 // pred_region
      %s34 = ssub.s32 128, 128
      %35 = vsyncadd [#allocation3], %s34
      %s37 = sshll.u32 [#allocation2], 4
      %s38 = int_to_ptr.vmem [resolvable:$true] %s37
      %40 = dma.hbm_to_vmem [thread:$0]  %s0, 128, %s38, [#allocation3]
    $region5: #{tpu_custom_call.1} parent=1 // pred_fallthru
      _
    // Predicated region
    $region6: #{tpu_custom_call.1} parent=1 // pred_check
      _
    $region7: #{tpu_custom_call.1} parent=1 // pred_check_branch
      %42 = sbr.rel (0) target = $region9
    $region8: #{tpu_custom_call.1} parent=1 // pred_region
      %s44 = ssub.s32 512, 512
      %45 = vsyncadd [#allocation6], %s44
      %s46 = sshll.u32 [#allocation5], 4
      %s47 = int_to_ptr.vmem [resolvable:$true] %s46
      %52 = dma.hbm_to_vmem [thread:$0]  %s1, 512, %s47, [#allocation6], 128, 128, 8
    $region9: #{tpu_custom_call.1} parent=1 // pred_fallthru
      _
    // Predicated region
    $region10: #{tpu_custom_call.1} parent=1 // pred_check
      _
    $region11: #{tpu_custom_call.1} parent=1 // pred_check_branch
      %54 = sbr.rel (0) target = $region13
    $region12: #{tpu_custom_call.1} parent=1 // pred_region
      _
    $region13: #{tpu_custom_call.1} parent=1 // pred_fallthru
      _
    // Predicated region
    $region14: #{tpu_custom_call.1} parent=1 // pred_check
      _
    $region15: #{tpu_custom_call.1} parent=1 // pred_check_branch
      %56 = sbr.rel (0) target = $region17
    $region16: #{tpu_custom_call.1} parent=1 // pred_region
      %s58 = ssub.s32 512, 512
      %59 = vsyncadd [#allocation6], %s58
      %s60 = sshll.u32 [#allocation7], 4
      %s61 = int_to_ptr.vmem [resolvable:$true] %s60
      %66 = dma.hbm_to_vmem [thread:$0]  %s3, 512, %s61, [#allocation6], 128, 128, 8
    $region17: #{tpu_custom_call.1} parent=1 // pred_fallthru
      _
    // Predicated region
    $region18: #{tpu_custom_call.1} parent=1 // pred_check
      _
    $region19: #{tpu_custom_call.1} parent=1 // pred_check_branch
      %68 = sbr.rel (0) target = $region21
    $region20: #{tpu_custom_call.1} parent=1 // pred_region
      _
    $region21: #{tpu_custom_call.1} parent=1 // pred_fallthru
      _
    // Predicated region
    $region22: #{tpu_custom_call.1} parent=1 // pred_check
      _
    $region23: #{tpu_custom_call.1} parent=1 // pred_check_branch
      %70 = sbr.rel (0) target = $region25
    $region24: #{tpu_custom_call.1} parent=1 // pred_region
      %s72 = ssub.s32 2048, 2048
      %73 = vsyncadd [#allocation9], %s72
      %s74 = sshll.u32 [#allocation8], 4
      %s75 = int_to_ptr.vmem [resolvable:$true] %s74
      %80 = dma.hbm_to_vmem [thread:$0]  %s5, 2048, %s75, [#allocation9], 128, 128, 8
    $region25: #{tpu_custom_call.1} parent=1 // pred_fallthru
      _
    // Predicated region
    $region26: #{tpu_custom_call.1} parent=1 // pred_check
      _
    $region27: #{tpu_custom_call.1} parent=1 // pred_check_branch
      %82 = sbr.rel (0) target = $region29
    $region28: #{tpu_custom_call.1} parent=1 // pred_region
      _
    $region29: #{tpu_custom_call.1} parent=1 // pred_fallthru
      _
    // Predicated region
    $region30: #{tpu_custom_call.1} parent=1 // pred_check
      _
    $region31: #{tpu_custom_call.1} parent=1 // pred_check_branch
      %84 = sbr.rel (0) target = $region33
    $region32: #{tpu_custom_call.1} parent=1 // pred_region
      %s86 = ssub.s32 2048, 2048
      %87 = vsyncadd [#allocation9], %s86
      %s88 = sshll.u32 [#allocation10], 4
      %s89 = int_to_ptr.vmem [resolvable:$true] %s88
      %94 = dma.hbm_to_vmem [thread:$0]  %s7, 2048, %s89, [#allocation9], 128, 128, 8
    $region33: #{tpu_custom_call.1} parent=1 // pred_fallthru
      _
    // Predicated region
    $region34: #{tpu_custom_call.1} parent=1 // pred_check
      _
    $region35: #{tpu_custom_call.1} parent=1 // pred_check_branch
      %96 = sbr.rel (0) target = $region37
    $region36: #{tpu_custom_call.1} parent=1 // pred_region
      _
    $region37: #{tpu_custom_call.1} parent=1 // pred_fallthru
      _
    // Predicated region
    $region38: #{tpu_custom_call.1} parent=1 // pred_check
      _
    $region39: #{tpu_custom_call.1} parent=1 // pred_check_branch
      %98 = sbr.rel (0) target = $region41
    $region40: #{tpu_custom_call.1} parent=1 // pred_region
      %s100 = ssub.s32 2048, 2048
      %101 = vsyncadd [#allocation12], %s100
      %s102 = sshll.u32 [#allocation11], 4
      %s103 = int_to_ptr.vmem [resolvable:$true] %s102
      %108 = dma.hbm_to_vmem [thread:$0]  %s9, 2048, %s103, [#allocation12], 128, 128, 8
    $region41: #{tpu_custom_call.1} parent=1 // pred_fallthru
      _
    // Predicated region
    $region42: #{tpu_custom_call.1} parent=1 // pred_check
      _
    $region43: #{tpu_custom_call.1} parent=1 // pred_check_branch
      %110 = sbr.rel (0) target = $region45
    $region44: #{tpu_custom_call.1} parent=1 // pred_region
      %s112 = ssub.s32 2048, 2048
      %113 = vsyncadd [#allocation12], %s112
      %s114 = sshll.u32 [#allocation13], 4
      %s115 = int_to_ptr.vmem [resolvable:$true] %s114
      %120 = dma.hbm_to_vmem [thread:$0]  %s10, 2048, %s115, [#allocation12], 128, 128, 8
    $region45: #{tpu_custom_call.1} parent=1 // pred_fallthru
      _
    // Predicated region
    $region46: #{tpu_custom_call.1} parent=1 // pred_check
      _
    $region47: #{tpu_custom_call.1} parent=1 // pred_check_branch
      %122 = sbr.rel (0) target = $region49
    $region48: #{tpu_custom_call.1} parent=1 // pred_region
      _
    $region49: #{tpu_custom_call.1} parent=1 // pred_fallthru
      _
    // Predicated region
    $region50: #{tpu_custom_call.1} parent=1 // pred_check
      _
    $region51: #{tpu_custom_call.1} parent=1 // pred_check_branch
      %124 = sbr.rel (0) target = $region53
    $region52: #{tpu_custom_call.1} parent=1 // pred_region
      %s126 = ssub.s32 2048, 2048
      %127 = vsyncadd [#allocation15], %s126
      %s128 = sshll.u32 [#allocation14], 4
      %s129 = int_to_ptr.vmem [resolvable:$true] %s128
      %134 = dma.hbm_to_vmem [thread:$0]  %s12, 2048, %s129, [#allocation15], 128, 128, 8
    $region53: #{tpu_custom_call.1} parent=1 // pred_fallthru
      _
    // Predicated region
    $region54: #{tpu_custom_call.1} parent=1 // pred_check
      _
    $region55: #{tpu_custom_call.1} parent=1 // pred_check_branch
      %136 = sbr.rel (0) target = $region57
    $region56: #{tpu_custom_call.1} parent=1 // pred_region
      %137 = dma.done [#allocation3], 128
    $region57: #{tpu_custom_call.1} parent=1 // pred_fallthru
      _
    // Predicated region
    $region58: #{tpu_custom_call.1} parent=1 // pred_check
      _
    $region59: #{tpu_custom_call.1} parent=1 // pred_check_branch
      %139 = sbr.rel (0) target = $region61
    $region60: #{tpu_custom_call.1} parent=1 // pred_region
      %140 = dma.done [#allocation6], 512
    $region61: #{tpu_custom_call.1} parent=1 // pred_fallthru
      _
    // Predicated region
    $region62: #{tpu_custom_call.1} parent=1 // pred_check
      _
    $region63: #{tpu_custom_call.1} parent=1 // pred_check_branch
      %142 = sbr.rel (0) target = $region65
    $region64: #{tpu_custom_call.1} parent=1 // pred_region
      %143 = dma.done [#allocation6], 512
    $region65: #{tpu_custom_call.1} parent=1 // pred_fallthru
      _
    // Predicated region
    $region66: #{tpu_custom_call.1} parent=1 // pred_check
      _
    $region67: #{tpu_custom_call.1} parent=1 // pred_check_branch
      %145 = sbr.rel (0) target = $region69
    $region68: #{tpu_custom_call.1} parent=1 // pred_region
      %146 = dma.done [#allocation9], 2048
    $region69: #{tpu_custom_call.1} parent=1 // pred_fallthru
      _
    // Predicated region
    $region70: #{tpu_custom_call.1} parent=1 // pred_check
      _
    $region71: #{tpu_custom_call.1} parent=1 // pred_check_branch
      %148 = sbr.rel (0) target = $region73
    $region72: #{tpu_custom_call.1} parent=1 // pred_region
      %149 = dma.done [#allocation9], 2048
    $region73: #{tpu_custom_call.1} parent=1 // pred_fallthru
      _
    // Predicated region
    $region74: #{tpu_custom_call.1} parent=1 // pred_check
      _
    $region75: #{tpu_custom_call.1} parent=1 // pred_check_branch
      %151 = sbr.rel (0) target = $region77
    $region76: #{tpu_custom_call.1} parent=1 // pred_region
      %152 = dma.done [#allocation12], 2048
    $region77: #{tpu_custom_call.1} parent=1 // pred_fallthru
      _
    // Predicated region
    $region78: #{tpu_custom_call.1} parent=1 // pred_check
      _
    $region79: #{tpu_custom_call.1} parent=1 // pred_check_branch
      %154 = sbr.rel (0) target = $region81
    $region80: #{tpu_custom_call.1} parent=1 // pred_region
      %155 = dma.done [#allocation12], 2048
    $region81: #{tpu_custom_call.1} parent=1 // pred_fallthru
      _
    // Predicated region
    $region82: #{tpu_custom_call.1} parent=1 // pred_check
      _
    $region83: #{tpu_custom_call.1} parent=1 // pred_check_branch
      %157 = sbr.rel (0) target = $region85
    $region84: #{tpu_custom_call.1} parent=1 // pred_region
      %158 = dma.done [#allocation15], 2048
    $region85: #{tpu_custom_call.1} parent=1 // pred_fallthru
      _
    %v159 = vld [vmem:[#allocation2] sm:$0xff]
    %v160 = vld [vmem:[#allocation5] sm:$0xff]
    %v161 = vld [vmem:[#allocation5 + $0x8] sm:$0xff]
    %v162 = vld [vmem:[#allocation5 + $0x10] sm:$0xff]
    %v163 = vld [vmem:[#allocation5 + $0x18] sm:$0xff]
    %v164 = vld [vmem:[%s2] sm:$0x1]
    %v166 = vlaneseq
    %v167 = vshrl.u32 %v166, 7
    %v168 = vsub.s32 0, %v167
    %v169 = vrot.slane %v164, %v168
    %vm171 = vcmask 261120
    %v173 = vsel %vm171, %v159, 0
    %175 = vmatprep.subr.mxu0 0.0
    %176 = vmatpush1.msra.mxu0 %v160
    %177 = vmatprep.subr.mxu0 0.0
    %178 = vmatpush1.msra.mxu0 %v161
    %179 = vmatprep.subr.mxu0 0.0
    %180 = vmatpush1.msra.mxu0 %v162
    %181 = vmatprep.subr.mxu0 0.0
    %182 = vmatpush1.msra.mxu0 %v163
    %183 = vmatprep.subr.mxu0 0.0
    %184 = vmatpush1.msra.mxu0 0.0
    %185 = vmatprep.subr.mxu0 0.0
    %186 = vmatpush1.msra.mxu0 0.0
    %187 = vmatprep.subr.mxu0 0.0
    %188 = vmatpush1.msra.mxu0 0.0
    %189 = vmatprep.subr.mxu0 0.0
    %190 = vmatpush1.msra.mxu0 0.0
    %191 = vmatprep.subr.mxu0 0.0
    %192 = vmatpush1.msra.mxu0 0.0
    %193 = vmatprep.subr.mxu0 0.0
    %194 = vmatpush1.msra.mxu0 0.0
    %195 = vmatprep.subr.mxu0 0.0
    %196 = vmatpush1.msra.mxu0 0.0
    %197 = vmatprep.subr.mxu0 0.0
    %198 = vmatpush1.msra.mxu0 0.0
    %199 = vmatprep.subr.mxu0 0.0
    %200 = vmatpush1.msra.mxu0 0.0
    %201 = vmatprep.subr.mxu0 0.0
    %202 = vmatpush1.msra.mxu0 0.0
    %203 = vmatprep.subr.mxu0 0.0
    %204 = vmatpush1.msra.mxu0 0.0
    %205 = vmatprep.subr.mxu0 0.0
    %206 = vmatpush1.msra.mxu0 0.0
    %207 = vmatprep.subr.mxu0 0.0
    %208 = vmatpush1.msra.mxu0 0.0
    %209 = vmatprep.subr.mxu0 0.0
    %210 = vmatpush1.msra.mxu0 0.0
    %211 = vmatprep.subr.mxu0 0.0
    %212 = vmatpush1.msra.mxu0 0.0
    %213 = vmatprep.subr.mxu0 0.0
    %214 = vmatpush1.msra.mxu0 0.0
    %215 = vmatprep.subr.mxu0 0.0
    %216 = vmatpush1.msra.mxu0 0.0
    %217 = vmatprep.subr.mxu0 0.0
    %218 = vmatpush1.msra.mxu0 0.0
    %219 = vmatprep.subr.mxu0 0.0
    %220 = vmatpush1.msra.mxu0 0.0
    %221 = vmatprep.subr.mxu0 0.0
    %222 = vmatpush1.msra.mxu0 0.0
    %223 = vmatprep.subr.mxu0 0.0
    %224 = vmatpush1.msra.mxu0 0.0
    %225 = vmatprep.subr.mxu0 0.0
    %226 = vmatpush1.msra.mxu0 0.0
    %227 = vmatprep.subr.mxu0 0.0
    %228 = vmatpush1.msra.mxu0 0.0
    %229 = vmatprep.subr.mxu0 0.0
    %230 = vmatpush1.msra.mxu0 0.0
    %231 = vmatprep.subr.mxu0 0.0
    %232 = vmatpush1.msra.mxu0 0.0
    %233 = vmatprep.subr.mxu0 0.0
    %234 = vmatpush1.msra.mxu0 0.0
    %235 = vmatprep.subr.mxu0 0.0
    %236 = vmatpush1.msra.mxu0 0.0
    %237 = vmatprep.subr.mxu0 0.0
    %238 = vmatpush1.msra.mxu0 0.0
    %239 = vmatprep.mubr.f32.mxu0 0.0
    %240 = vmatmul.mubr.f32.gmra.mrb[0].mxu0 %v173
    %v241 = vpop.f32.mrb[0].mxu0
    %v242 = vadd.f32 %v169, %v241
    %v243 = vpop.f32.mrb[0].mxu0
    %244 = vdwg.mxu0
    %245 = vadd.xlane.f32.xlu0 %v242
    %v246 = vpop.xlane.xlu0 %245
    %v247 = vmul.f32 %v246, 0.03125
    %v248 = vsub.f32 %v242, %v247
    %v249 = vmul.f32 %v248, %v248
    %250 = vadd.xlane.f32.xlu0 %v249
    %v251 = vpop.xlane.xlu0 %250
    %v252 = vmul.f32 %v247, 96.0
    %v253 = vmul.f32 %v252, %v247
    %v254 = vsub.f32 %v251, %v253
    %v255 = vmul.f32 %v254, 0.03125
    %v256 = vadd.f32 %v255, 1e-05
    %v257 = vrsqrt.pop %v256
    %v258 = vmul.f32 %v248, %v257
    %v259 = vld [vmem:[#allocation7] sm:$0xff]
    %v260 = vld [vmem:[#allocation7 + $0x8] sm:$0xff]
    %v261 = vld [vmem:[#allocation7 + $0x10] sm:$0xff]
    %v262 = vld [vmem:[#allocation7 + $0x18] sm:$0xff]
    %v263 = vld [vmem:[%s4] sm:$0x1]
    %v265 = vlaneseq
    %v266 = vshrl.u32 %v265, 7
    %v267 = vsub.s32 0, %v266
    %v268 = vrot.slane %v263, %v267
    %270 = vmatprep.subr.mxu0 0.0
    %271 = vmatpush1.msra.mxu0 %v259
    %272 = vmatprep.subr.mxu0 0.0
    %273 = vmatpush1.msra.mxu0 %v260
    %274 = vmatprep.subr.mxu0 0.0
    %275 = vmatpush1.msra.mxu0 %v261
    %276 = vmatprep.subr.mxu0 0.0
    %277 = vmatpush1.msra.mxu0 %v262
    %278 = vmatprep.subr.mxu0 0.0
    %279 = vmatpush1.msra.mxu0 0.0
    %280 = vmatprep.subr.mxu0 0.0
    %281 = vmatpush1.msra.mxu0 0.0
    %282 = vmatprep.subr.mxu0 0.0
    %283 = vmatpush1.msra.mxu0 0.0
    %284 = vmatprep.subr.mxu0 0.0
    %285 = vmatpush1.msra.mxu0 0.0
    %286 = vmatprep.subr.mxu0 0.0
    %287 = vmatpush1.msra.mxu0 0.0
    %288 = vmatprep.subr.mxu0 0.0
    %289 = vmatpush1.msra.mxu0 0.0
    %290 = vmatprep.subr.mxu0 0.0
    %291 = vmatpush1.msra.mxu0 0.0
    %292 = vmatprep.subr.mxu0 0.0
    %293 = vmatpush1.msra.mxu0 0.0
    %294 = vmatprep.subr.mxu0 0.0
    %295 = vmatpush1.msra.mxu0 0.0
    %296 = vmatprep.subr.mxu0 0.0
    %297 = vmatpush1.msra.mxu0 0.0
    %298 = vmatprep.subr.mxu0 0.0
    %299 = vmatpush1.msra.mxu0 0.0
    %300 = vmatprep.subr.mxu0 0.0
    %301 = vmatpush1.msra.mxu0 0.0
    %302 = vmatprep.subr.mxu0 0.0
    %303 = vmatpush1.msra.mxu0 0.0
    %304 = vmatprep.subr.mxu0 0.0
    %305 = vmatpush1.msra.mxu0 0.0
    %306 = vmatprep.subr.mxu0 0.0
    %307 = vmatpush1.msra.mxu0 0.0
    %308 = vmatprep.subr.mxu0 0.0
    %309 = vmatpush1.msra.mxu0 0.0
    %310 = vmatprep.subr.mxu0 0.0
    %311 = vmatpush1.msra.mxu0 0.0
    %312 = vmatprep.subr.mxu0 0.0
    %313 = vmatpush1.msra.mxu0 0.0
    %314 = vmatprep.subr.mxu0 0.0
    %315 = vmatpush1.msra.mxu0 0.0
    %316 = vmatprep.subr.mxu0 0.0
    %317 = vmatpush1.msra.mxu0 0.0
    %318 = vmatprep.subr.mxu0 0.0
    %319 = vmatpush1.msra.mxu0 0.0
    %320 = vmatprep.subr.mxu0 0.0
    %321 = vmatpush1.msra.mxu0 0.0
    %322 = vmatprep.subr.mxu0 0.0
    %323 = vmatpush1.msra.mxu0 0.0
    %324 = vmatprep.subr.mxu0 0.0
    %325 = vmatpush1.msra.mxu0 0.0
    %326 = vmatprep.subr.mxu0 0.0
    %327 = vmatpush1.msra.mxu0 0.0
    %328 = vmatprep.subr.mxu0 0.0
    %329 = vmatpush1.msra.mxu0 0.0
    %330 = vmatprep.subr.mxu0 0.0
    %331 = vmatpush1.msra.mxu0 0.0
    %332 = vmatprep.subr.mxu0 0.0
    %333 = vmatpush1.msra.mxu0 0.0
    %334 = vmatprep.mubr.f32.mxu0 0.0
    %335 = vmatmul.mubr.f32.gmra.mrb[0].mxu0 %v173
    %v336 = vpop.f32.mrb[0].mxu0
    %v337 = vadd.f32 %v268, %v336
    %v338 = vpop.f32.mrb[0].mxu0
    %339 = vdwg.mxu0
    %340 = vadd.xlane.f32.xlu0 %v337
    %v341 = vpop.xlane.xlu0 %340
    %v342 = vmul.f32 %v341, 0.03125
    %v343 = vsub.f32 %v337, %v342
    %v344 = vmul.f32 %v343, %v343
    %345 = vadd.xlane.f32.xlu0 %v344
    %v346 = vpop.xlane.xlu0 %345
    %v347 = vmul.f32 %v342, 96.0
    %v348 = vmul.f32 %v347, %v342
    %v349 = vsub.f32 %v346, %v348
    %v350 = vmul.f32 %v349, 0.03125
    %v351 = vadd.f32 %v350, 1e-05
    %v352 = vrsqrt.pop %v351
    %v353 = vmul.f32 %v343, %v352
    %v354 = vld [vmem:[#allocation8] sm:$0xff]
    %v355 = vld [vmem:[#allocation8 + $0x8] sm:$0xff]
    %v356 = vld [vmem:[#allocation8 + $0x10] sm:$0xff]
    %v357 = vld [vmem:[#allocation8 + $0x18] sm:$0xff]
    %v358 = vld [vmem:[#allocation8 + $0x20] sm:$0xff]
    %v359 = vld [vmem:[#allocation8 + $0x28] sm:$0xff]
    %v360 = vld [vmem:[#allocation8 + $0x30] sm:$0xff]
    %v361 = vld [vmem:[#allocation8 + $0x38] sm:$0xff]
    %v362 = vld [vmem:[#allocation8 + $0x40] sm:$0xff]
    %v363 = vld [vmem:[#allocation8 + $0x48] sm:$0xff]
    %v364 = vld [vmem:[#allocation8 + $0x50] sm:$0xff]
    %v365 = vld [vmem:[#allocation8 + $0x58] sm:$0xff]
    %v366 = vld [vmem:[#allocation8 + $0x60] sm:$0xff]
    %v367 = vld [vmem:[#allocation8 + $0x68] sm:$0xff]
    %v368 = vld [vmem:[#allocation8 + $0x70] sm:$0xff]
    %v369 = vld [vmem:[#allocation8 + $0x78] sm:$0xff]
    %v370 = vld [vmem:[%s6] sm:$0x1]
    %v372 = vlaneseq
    %v373 = vshrl.u32 %v372, 7
    %v374 = vsub.s32 0, %v373
    %v375 = vrot.slane %v370, %v374
    %377 = vmatprep.subr.mxu0 0.0
    %378 = vmatpush1.msra.mxu0 %v354
    %379 = vmatprep.subr.mxu0 0.0
    %380 = vmatpush1.msra.mxu0 %v355
    %381 = vmatprep.subr.mxu0 0.0
    %382 = vmatpush1.msra.mxu0 %v356
    %383 = vmatprep.subr.mxu0 0.0
    %384 = vmatpush1.msra.mxu0 %v357
    %385 = vmatprep.subr.mxu0 0.0
    %386 = vmatpush1.msra.mxu0 %v358
    %387 = vmatprep.subr.mxu0 0.0
    %388 = vmatpush1.msra.mxu0 %v359
    %389 = vmatprep.subr.mxu0 0.0
    %390 = vmatpush1.msra.mxu0 %v360
    %391 = vmatprep.subr.mxu0 0.0
    %392 = vmatpush1.msra.mxu0 %v361
    %393 = vmatprep.subr.mxu0 0.0
    %394 = vmatpush1.msra.mxu0 %v362
    %395 = vmatprep.subr.mxu0 0.0
    %396 = vmatpush1.msra.mxu0 %v363
    %397 = vmatprep.subr.mxu0 0.0
    %398 = vmatpush1.msra.mxu0 %v364
    %399 = vmatprep.subr.mxu0 0.0
    %400 = vmatpush1.msra.mxu0 %v365
    %401 = vmatprep.subr.mxu0 0.0
    %402 = vmatpush1.msra.mxu0 %v366
    %403 = vmatprep.subr.mxu0 0.0
    %404 = vmatpush1.msra.mxu0 %v367
    %405 = vmatprep.subr.mxu0 0.0
    %406 = vmatpush1.msra.mxu0 %v368
    %407 = vmatprep.subr.mxu0 0.0
    %408 = vmatpush1.msra.mxu0 %v369
    %409 = vmatprep.subr.mxu0 0.0
    %410 = vmatpush1.msra.mxu0 0.0
    %411 = vmatprep.subr.mxu0 0.0
    %412 = vmatpush1.msra.mxu0 0.0
    %413 = vmatprep.subr.mxu0 0.0
    %414 = vmatpush1.msra.mxu0 0.0
    %415 = vmatprep.subr.mxu0 0.0
    %416 = vmatpush1.msra.mxu0 0.0
    %417 = vmatprep.subr.mxu0 0.0
    %418 = vmatpush1.msra.mxu0 0.0
    %419 = vmatprep.subr.mxu0 0.0
    %420 = vmatpush1.msra.mxu0 0.0
    %421 = vmatprep.subr.mxu0 0.0
    %422 = vmatpush1.msra.mxu0 0.0
    %423 = vmatprep.subr.mxu0 0.0
    %424 = vmatpush1.msra.mxu0 0.0
    %425 = vmatprep.subr.mxu0 0.0
    %426 = vmatpush1.msra.mxu0 0.0
    %427 = vmatprep.subr.mxu0 0.0
    %428 = vmatpush1.msra.mxu0 0.0
    %429 = vmatprep.subr.mxu0 0.0
    %430 = vmatpush1.msra.mxu0 0.0
    %431 = vmatprep.subr.mxu0 0.0
    %432 = vmatpush1.msra.mxu0 0.0
    %433 = vmatprep.subr.mxu0 0.0
    %434 = vmatpush1.msra.mxu0 0.0
    %435 = vmatprep.subr.mxu0 0.0
    %436 = vmatpush1.msra.mxu0 0.0
    %437 = vmatprep.subr.mxu0 0.0
    %438 = vmatpush1.msra.mxu0 0.0
    %439 = vmatprep.subr.mxu0 0.0
    %440 = vmatpush1.msra.mxu0 0.0
    %441 = vmatprep.mubr.f32.mxu0 0.0
    %442 = vmatmul.mubr.f32.gmra.mrb[0].mxu0 %v258
    %v443 = vpop.f32.mrb[0].mxu0
    %v444 = vadd.f32 %v375, %v443
    %v445 = vpop.f32.mrb[0].mxu0
    %446 = vdwg.mxu0
    %447 = vadd.xlane.f32.xlu0 %v444
    %v448 = vpop.xlane.xlu0 %447
    %v449 = vmul.f32 %v448, 0.125
    %v450 = vsub.f32 %v444, %v449
    %v451 = vmul.f32 %v450, %v450
    %452 = vadd.xlane.f32.xlu0 %v451
    %v453 = vpop.xlane.xlu0 %452
    %v454 = vmul.f32 %v449, 120.0
    %v455 = vmul.f32 %v454, %v449
    %v456 = vsub.f32 %v453, %v455
    %v457 = vmul.f32 %v456, 0.125
    %v458 = vadd.f32 %v457, 1e-05
    %v459 = vrsqrt.pop %v458
    %v460 = vmul.f32 %v450, %v459
    %461 = vst [vmem:[#allocation16] sm:$0xff] %v258
    %462 = vst [vmem:[#allocation17] sm:$0xff] %v353
    %463 = vst [vmem:[#allocation19] sm:$0xff] %v460
    %v464 = vlaneseq
    %v465 = vand.u32 %v464, 127
    %vm466 = vcmp.lt.s32.totalorder %v465, 8
    %v467 = vsel %vm466, %v460, -1e+30
    %468 = vmax.xlane.f32.xlu0 %v467
    %v469 = vpop.xlane.xlu0 %468
    %vm470 = vcmp.ge.f32.partialorder %v467, %v469
    %v471 = vcvt.s32.f32 %v465
    %v472 = vsel %vm470, %v471, 128.0
    %473 = vmin.xlane.f32.xlu0 %v472
    %v474 = vpop.xlane.xlu0 %473
    %v475 = vcvt.f32.s32.to.zero.pseudo %v474
    %v476 = vld [vmem:[#allocation10] sm:$0xff]
    %v477 = vld [vmem:[#allocation10 + $0x8] sm:$0xff]
    %v478 = vld [vmem:[#allocation10 + $0x10] sm:$0xff]
    %v479 = vld [vmem:[#allocation10 + $0x18] sm:$0xff]
    %v480 = vld [vmem:[#allocation10 + $0x20] sm:$0xff]
    %v481 = vld [vmem:[#allocation10 + $0x28] sm:$0xff]
    %v482 = vld [vmem:[#allocation10 + $0x30] sm:$0xff]
    %v483 = vld [vmem:[#allocation10 + $0x38] sm:$0xff]
    %v484 = vld [vmem:[#allocation10 + $0x40] sm:$0xff]
    %v485 = vld [vmem:[#allocation10 + $0x48] sm:$0xff]
    %v486 = vld [vmem:[#allocation10 + $0x50] sm:$0xff]
    %v487 = vld [vmem:[#allocation10 + $0x58] sm:$0xff]
    %v488 = vld [vmem:[#allocation10 + $0x60] sm:$0xff]
    %v489 = vld [vmem:[#allocation10 + $0x68] sm:$0xff]
    %v490 = vld [vmem:[#allocation10 + $0x70] sm:$0xff]
    %v491 = vld [vmem:[#allocation10 + $0x78] sm:$0xff]
    %v492 = vld [vmem:[%s8] sm:$0x1]
    %v494 = vlaneseq
    %v495 = vshrl.u32 %v494, 7
    %v496 = vsub.s32 0, %v495
    %v497 = vrot.slane %v492, %v496
    %499 = vmatprep.subr.mxu0 0.0
    %500 = vmatpush1.msra.mxu0 %v476
    %501 = vmatprep.subr.mxu0 0.0
    %502 = vmatpush1.msra.mxu0 %v477
    %503 = vmatprep.subr.mxu0 0.0
    %504 = vmatpush1.msra.mxu0 %v478
    %505 = vmatprep.subr.mxu0 0.0
    %506 = vmatpush1.msra.mxu0 %v479
    %507 = vmatprep.subr.mxu0 0.0
    %508 = vmatpush1.msra.mxu0 %v480
    %509 = vmatprep.subr.mxu0 0.0
    %510 = vmatpush1.msra.mxu0 %v481
    %511 = vmatprep.subr.mxu0 0.0
    %512 = vmatpush1.msra.mxu0 %v482
    %513 = vmatprep.subr.mxu0 0.0
    %514 = vmatpush1.msra.mxu0 %v483
    %515 = vmatprep.subr.mxu0 0.0
    %516 = vmatpush1.msra.mxu0 %v484
    %517 = vmatprep.subr.mxu0 0.0
    %518 = vmatpush1.msra.mxu0 %v485
    %519 = vmatprep.subr.mxu0 0.0
    %520 = vmatpush1.msra.mxu0 %v486
    %521 = vmatprep.subr.mxu0 0.0
    %522 = vmatpush1.msra.mxu0 %v487
    %523 = vmatprep.subr.mxu0 0.0
    %524 = vmatpush1.msra.mxu0 %v488
    %525 = vmatprep.subr.mxu0 0.0
    %526 = vmatpush1.msra.mxu0 %v489
    %527 = vmatprep.subr.mxu0 0.0
    %528 = vmatpush1.msra.mxu0 %v490
    %529 = vmatprep.subr.mxu0 0.0
    %530 = vmatpush1.msra.mxu0 %v491
    %531 = vmatprep.subr.mxu0 0.0
    %532 = vmatpush1.msra.mxu0 0.0
    %533 = vmatprep.subr.mxu0 0.0
    %534 = vmatpush1.msra.mxu0 0.0
    %535 = vmatprep.subr.mxu0 0.0
    %536 = vmatpush1.msra.mxu0 0.0
    %537 = vmatprep.subr.mxu0 0.0
    %538 = vmatpush1.msra.mxu0 0.0
    %539 = vmatprep.subr.mxu0 0.0
    %540 = vmatpush1.msra.mxu0 0.0
    %541 = vmatprep.subr.mxu0 0.0
    %542 = vmatpush1.msra.mxu0 0.0
    %543 = vmatprep.subr.mxu0 0.0
    %544 = vmatpush1.msra.mxu0 0.0
    %545 = vmatprep.subr.mxu0 0.0
    %546 = vmatpush1.msra.mxu0 0.0
    %547 = vmatprep.subr.mxu0 0.0
    %548 = vmatpush1.msra.mxu0 0.0
    %549 = vmatprep.subr.mxu0 0.0
    %550 = vmatpush1.msra.mxu0 0.0
    %551 = vmatprep.subr.mxu0 0.0
    %552 = vmatpush1.msra.mxu0 0.0
    %553 = vmatprep.subr.mxu0 0.0
    %554 = vmatpush1.msra.mxu0 0.0
    %555 = vmatprep.subr.mxu0 0.0
    %556 = vmatpush1.msra.mxu0 0.0
    %557 = vmatprep.subr.mxu0 0.0
    %558 = vmatpush1.msra.mxu0 0.0
    %559 = vmatprep.subr.mxu0 0.0
    %560 = vmatpush1.msra.mxu0 0.0
    %561 = vmatprep.subr.mxu0 0.0
    %562 = vmatpush1.msra.mxu0 0.0
    %563 = vmatprep.mubr.f32.mxu0 0.0
    %564 = vmatmul.mubr.f32.gmra.mrb[0].mxu0 %v353
    %v565 = vpop.f32.mrb[0].mxu0
    %v566 = vadd.f32 %v497, %v565
    %v567 = vpop.f32.mrb[0].mxu0
    %568 = vdwg.mxu0
    %v569 = vmul.u32 %v475, 16
    %vm570 = vcmp.ge.s32.totalorder %v465, %v569
    %v571 = vadd.s32 %v569, 16
    %vm572 = vcmp.lt.s32.totalorder %v465, %v571
    %vm573 = vmand %vm570, %vm572
    %v574 = vsel %vm573, %v566, 0.0
    %v575 = vld [vmem:[#allocation11] sm:$0xff]
    %v576 = vld [vmem:[#allocation11 + $0x8] sm:$0xff]
    %v577 = vld [vmem:[#allocation11 + $0x10] sm:$0xff]
    %v578 = vld [vmem:[#allocation11 + $0x18] sm:$0xff]
    %v579 = vld [vmem:[#allocation11 + $0x20] sm:$0xff]
    %v580 = vld [vmem:[#allocation11 + $0x28] sm:$0xff]
    %v581 = vld [vmem:[#allocation11 + $0x30] sm:$0xff]
    %v582 = vld [vmem:[#allocation11 + $0x38] sm:$0xff]
    %v583 = vld [vmem:[#allocation11 + $0x40] sm:$0xff]
    %v584 = vld [vmem:[#allocation11 + $0x48] sm:$0xff]
    %v585 = vld [vmem:[#allocation11 + $0x50] sm:$0xff]
    %v586 = vld [vmem:[#allocation11 + $0x58] sm:$0xff]
    %v587 = vld [vmem:[#allocation11 + $0x60] sm:$0xff]
    %v588 = vld [vmem:[#allocation11 + $0x68] sm:$0xff]
    %v589 = vld [vmem:[#allocation11 + $0x70] sm:$0xff]
    %v590 = vld [vmem:[#allocation11 + $0x78] sm:$0xff]
    %591 = vmatprep.subr.mxu0 0.0
    %592 = vmatpush1.msra.mxu0 %v575
    %593 = vmatprep.subr.mxu0 0.0
    %594 = vmatpush1.msra.mxu0 %v576
    %595 = vmatprep.subr.mxu0 0.0
    %596 = vmatpush1.msra.mxu0 %v577
    %597 = vmatprep.subr.mxu0 0.0
    %598 = vmatpush1.msra.mxu0 %v578
    %599 = vmatprep.subr.mxu0 0.0
    %600 = vmatpush1.msra.mxu0 %v579
    %601 = vmatprep.subr.mxu0 0.0
    %602 = vmatpush1.msra.mxu0 %v580
    %603 = vmatprep.subr.mxu0 0.0
    %604 = vmatpush1.msra.mxu0 %v581
    %605 = vmatprep.subr.mxu0 0.0
    %606 = vmatpush1.msra.mxu0 %v582
    %607 = vmatprep.subr.mxu0 0.0
    %608 = vmatpush1.msra.mxu0 %v583
    %609 = vmatprep.subr.mxu0 0.0
    %610 = vmatpush1.msra.mxu0 %v584
    %611 = vmatprep.subr.mxu0 0.0
    %612 = vmatpush1.msra.mxu0 %v585
    %613 = vmatprep.subr.mxu0 0.0
    %614 = vmatpush1.msra.mxu0 %v586
    %615 = vmatprep.subr.mxu0 0.0
    %616 = vmatpush1.msra.mxu0 %v587
    %617 = vmatprep.subr.mxu0 0.0
    %618 = vmatpush1.msra.mxu0 %v588
    %619 = vmatprep.subr.mxu0 0.0
    %620 = vmatpush1.msra.mxu0 %v589
    %621 = vmatprep.subr.mxu0 0.0
    %622 = vmatpush1.msra.mxu0 %v590
    %623 = vmatprep.subr.mxu0 0.0
    %624 = vmatpush1.msra.mxu0 0.0
    %625 = vmatprep.subr.mxu0 0.0
    %626 = vmatpush1.msra.mxu0 0.0
    %627 = vmatprep.subr.mxu0 0.0
    %628 = vmatpush1.msra.mxu0 0.0
    %629 = vmatprep.subr.mxu0 0.0
    %630 = vmatpush1.msra.mxu0 0.0
    %631 = vmatprep.subr.mxu0 0.0
    %632 = vmatpush1.msra.mxu0 0.0
    %633 = vmatprep.subr.mxu0 0.0
    %634 = vmatpush1.msra.mxu0 0.0
    %635 = vmatprep.subr.mxu0 0.0
    %636 = vmatpush1.msra.mxu0 0.0
    %637 = vmatprep.subr.mxu0 0.0
    %638 = vmatpush1.msra.mxu0 0.0
    %639 = vmatprep.subr.mxu0 0.0
    %640 = vmatpush1.msra.mxu0 0.0
    %641 = vmatprep.subr.mxu0 0.0
    %642 = vmatpush1.msra.mxu0 0.0
    %643 = vmatprep.subr.mxu0 0.0
    %644 = vmatpush1.msra.mxu0 0.0
    %645 = vmatprep.subr.mxu0 0.0
    %646 = vmatpush1.msra.mxu0 0.0
    %647 = vmatprep.subr.mxu0 0.0
    %648 = vmatpush1.msra.mxu0 0.0
    %649 = vmatprep.subr.mxu0 0.0
    %650 = vmatpush1.msra.mxu0 0.0
    %651 = vmatprep.subr.mxu0 0.0
    %652 = vmatpush1.msra.mxu0 0.0
    %653 = vmatprep.subr.mxu0 0.0
    %654 = vmatpush1.msra.mxu0 0.0
    %655 = vmatprep.mubr.f32.mxu0 0.0
    %656 = vmatmul.mubr.f32.gmra.mrb[0].mxu0 %v574
    %v657 = vpop.f32.mrb[0].mxu0
    %v658 = vadd.f32 0.0, %v657
    %v659 = vpop.f32.mrb[0].mxu0
    %660 = vdwg.mxu0
    %661 = vadd.xlane.f32.xlu0 %v658
    %v662 = vpop.xlane.xlu0 %661
    %v663 = vmul.f32 %v662, 0.0625
    %v664 = vsub.f32 %v658, %v663
    %v665 = vmul.f32 %v664, %v664
    %666 = vadd.xlane.f32.xlu0 %v665
    %v667 = vpop.xlane.xlu0 %666
    %v668 = vmul.f32 %v663, 112.0
    %v669 = vmul.f32 %v668, %v663
    %v670 = vsub.f32 %v667, %v669
    %v671 = vmul.f32 %v670, 0.0625
    %v672 = vadd.f32 %v671, 1e-05
    %v673 = vrsqrt.pop %v672
    %v674 = vmul.f32 %v664, %v673
    %675 = vst [vmem:[#allocation20] sm:$0xff] %v674
    %v676 = vld [vmem:[#allocation13] sm:$0xff]
    %v677 = vld [vmem:[#allocation13 + $0x8] sm:$0xff]
    %v678 = vld [vmem:[#allocation13 + $0x10] sm:$0xff]
    %v679 = vld [vmem:[#allocation13 + $0x18] sm:$0xff]
    %v680 = vld [vmem:[#allocation13 + $0x20] sm:$0xff]
    %v681 = vld [vmem:[#allocation13 + $0x28] sm:$0xff]
    %v682 = vld [vmem:[#allocation13 + $0x30] sm:$0xff]
    %v683 = vld [vmem:[#allocation13 + $0x38] sm:$0xff]
    %v684 = vld [vmem:[#allocation13 + $0x40] sm:$0xff]
    %v685 = vld [vmem:[#allocation13 + $0x48] sm:$0xff]
    %v686 = vld [vmem:[#allocation13 + $0x50] sm:$0xff]
    %v687 = vld [vmem:[#allocation13 + $0x58] sm:$0xff]
    %v688 = vld [vmem:[#allocation13 + $0x60] sm:$0xff]
    %v689 = vld [vmem:[#allocation13 + $0x68] sm:$0xff]
    %v690 = vld [vmem:[#allocation13 + $0x70] sm:$0xff]
    %v691 = vld [vmem:[#allocation13 + $0x78] sm:$0xff]
    %v692 = vld [vmem:[%s11] sm:$0x1]
    %v694 = vlaneseq
    %v695 = vshrl.u32 %v694, 7
    %v696 = vsub.s32 0, %v695
    %v697 = vrot.slane %v692, %v696
    %699 = vmatprep.subr.mxu0 0.0
    %700 = vmatpush1.msra.mxu0 %v676
    %701 = vmatprep.subr.mxu0 0.0
    %702 = vmatpush1.msra.mxu0 %v677
    %703 = vmatprep.subr.mxu0 0.0
    %704 = vmatpush1.msra.mxu0 %v678
    %705 = vmatprep.subr.mxu0 0.0
    %706 = vmatpush1.msra.mxu0 %v679
    %707 = vmatprep.subr.mxu0 0.0
    %708 = vmatpush1.msra.mxu0 %v680
    %709 = vmatprep.subr.mxu0 0.0
    %710 = vmatpush1.msra.mxu0 %v681
    %711 = vmatprep.subr.mxu0 0.0
    %712 = vmatpush1.msra.mxu0 %v682
    %713 = vmatprep.subr.mxu0 0.0
    %714 = vmatpush1.msra.mxu0 %v683
    %715 = vmatprep.subr.mxu0 0.0
    %716 = vmatpush1.msra.mxu0 %v684
    %717 = vmatprep.subr.mxu0 0.0
    %718 = vmatpush1.msra.mxu0 %v685
    %719 = vmatprep.subr.mxu0 0.0
    %720 = vmatpush1.msra.mxu0 %v686
    %721 = vmatprep.subr.mxu0 0.0
    %722 = vmatpush1.msra.mxu0 %v687
    %723 = vmatprep.subr.mxu0 0.0
    %724 = vmatpush1.msra.mxu0 %v688
    %725 = vmatprep.subr.mxu0 0.0
    %726 = vmatpush1.msra.mxu0 %v689
    %727 = vmatprep.subr.mxu0 0.0
    %728 = vmatpush1.msra.mxu0 %v690
    %729 = vmatprep.subr.mxu0 0.0
    %730 = vmatpush1.msra.mxu0 %v691
    %731 = vmatprep.subr.mxu0 0.0
    %732 = vmatpush1.msra.mxu0 0.0
    %733 = vmatprep.subr.mxu0 0.0
    %734 = vmatpush1.msra.mxu0 0.0
    %735 = vmatprep.subr.mxu0 0.0
    %736 = vmatpush1.msra.mxu0 0.0
    %737 = vmatprep.subr.mxu0 0.0
    %738 = vmatpush1.msra.mxu0 0.0
    %739 = vmatprep.subr.mxu0 0.0
    %740 = vmatpush1.msra.mxu0 0.0
    %741 = vmatprep.subr.mxu0 0.0
    %742 = vmatpush1.msra.mxu0 0.0
    %743 = vmatprep.subr.mxu0 0.0
    %744 = vmatpush1.msra.mxu0 0.0
    %745 = vmatprep.subr.mxu0 0.0
    %746 = vmatpush1.msra.mxu0 0.0
    %747 = vmatprep.subr.mxu0 0.0
    %748 = vmatpush1.msra.mxu0 0.0
    %749 = vmatprep.subr.mxu0 0.0
    %750 = vmatpush1.msra.mxu0 0.0
    %751 = vmatprep.subr.mxu0 0.0
    %752 = vmatpush1.msra.mxu0 0.0
    %753 = vmatprep.subr.mxu0 0.0
    %754 = vmatpush1.msra.mxu0 0.0
    %755 = vmatprep.subr.mxu0 0.0
    %756 = vmatpush1.msra.mxu0 0.0
    %757 = vmatprep.subr.mxu0 0.0
    %758 = vmatpush1.msra.mxu0 0.0
    %759 = vmatprep.subr.mxu0 0.0
    %760 = vmatpush1.msra.mxu0 0.0
    %761 = vmatprep.subr.mxu0 0.0
    %762 = vmatpush1.msra.mxu0 0.0
    %763 = vmatprep.mubr.f32.mxu0 0.0
    %764 = vmatmul.mubr.f32.gmra.mrb[0].mxu0 %v353
    %v765 = vpop.f32.mrb[0].mxu0
    %v766 = vadd.f32 %v697, %v765
    %v767 = vpop.f32.mrb[0].mxu0
    %768 = vdwg.mxu0
    %v769 = vmul.u32 %v475, 8
    %vm770 = vcmp.ge.s32.totalorder %v465, %v769
    %v771 = vadd.s32 %v769, 8
    %vm772 = vcmp.lt.s32.totalorder %v465, %v771
    %vm773 = vmand %vm770, %vm772
    %v774 = vsel %vm773, %v766, 0.0
    %v775 = vld [vmem:[#allocation14] sm:$0xff]
    %v776 = vld [vmem:[#allocation14 + $0x8] sm:$0xff]
    %v777 = vld [vmem:[#allocation14 + $0x10] sm:$0xff]
    %v778 = vld [vmem:[#allocation14 + $0x18] sm:$0xff]
    %v779 = vld [vmem:[#allocation14 + $0x20] sm:$0xff]
    %v780 = vld [vmem:[#allocation14 + $0x28] sm:$0xff]
    %v781 = vld [vmem:[#allocation14 + $0x30] sm:$0xff]
    %v782 = vld [vmem:[#allocation14 + $0x38] sm:$0xff]
    %v783 = vld [vmem:[#allocation14 + $0x40] sm:$0xff]
    %v784 = vld [vmem:[#allocation14 + $0x48] sm:$0xff]
    %v785 = vld [vmem:[#allocation14 + $0x50] sm:$0xff]
    %v786 = vld [vmem:[#allocation14 + $0x58] sm:$0xff]
    %v787 = vld [vmem:[#allocation14 + $0x60] sm:$0xff]
    %v788 = vld [vmem:[#allocation14 + $0x68] sm:$0xff]
    %v789 = vld [vmem:[#allocation14 + $0x70] sm:$0xff]
    %v790 = vld [vmem:[#allocation14 + $0x78] sm:$0xff]
    %791 = vmatprep.subr.mxu0 0.0
    %792 = vmatpush1.msra.mxu0 %v775
    %793 = vmatprep.subr.mxu0 0.0
    %794 = vmatpush1.msra.mxu0 %v776
    %795 = vmatprep.subr.mxu0 0.0
    %796 = vmatpush1.msra.mxu0 %v777
    %797 = vmatprep.subr.mxu0 0.0
    %798 = vmatpush1.msra.mxu0 %v778
    %799 = vmatprep.subr.mxu0 0.0
    %800 = vmatpush1.msra.mxu0 %v779
    %801 = vmatprep.subr.mxu0 0.0
    %802 = vmatpush1.msra.mxu0 %v780
    %803 = vmatprep.subr.mxu0 0.0
    %804 = vmatpush1.msra.mxu0 %v781
    %805 = vmatprep.subr.mxu0 0.0
    %806 = vmatpush1.msra.mxu0 %v782
    %807 = vmatprep.subr.mxu0 0.0
    %808 = vmatpush1.msra.mxu0 %v783
    %809 = vmatprep.subr.mxu0 0.0
    %810 = vmatpush1.msra.mxu0 %v784
    %811 = vmatprep.subr.mxu0 0.0
    %812 = vmatpush1.msra.mxu0 %v785
    %813 = vmatprep.subr.mxu0 0.0
    %814 = vmatpush1.msra.mxu0 %v786
    %815 = vmatprep.subr.mxu0 0.0
    %816 = vmatpush1.msra.mxu0 %v787
    %817 = vmatprep.subr.mxu0 0.0
    %818 = vmatpush1.msra.mxu0 %v788
    %819 = vmatprep.subr.mxu0 0.0
    %820 = vmatpush1.msra.mxu0 %v789
    %821 = vmatprep.subr.mxu0 0.0
    %822 = vmatpush1.msra.mxu0 %v790
    %823 = vmatprep.subr.mxu0 0.0
    %824 = vmatpush1.msra.mxu0 0.0
    %825 = vmatprep.subr.mxu0 0.0
    %826 = vmatpush1.msra.mxu0 0.0
    %827 = vmatprep.subr.mxu0 0.0
    %828 = vmatpush1.msra.mxu0 0.0
    %829 = vmatprep.subr.mxu0 0.0
    %830 = vmatpush1.msra.mxu0 0.0
    %831 = vmatprep.subr.mxu0 0.0
    %832 = vmatpush1.msra.mxu0 0.0
    %833 = vmatprep.subr.mxu0 0.0
    %834 = vmatpush1.msra.mxu0 0.0
    %835 = vmatprep.subr.mxu0 0.0
    %836 = vmatpush1.msra.mxu0 0.0
    %837 = vmatprep.subr.mxu0 0.0
    %838 = vmatpush1.msra.mxu0 0.0
    %839 = vmatprep.subr.mxu0 0.0
    %840 = vmatpush1.msra.mxu0 0.0
    %841 = vmatprep.subr.mxu0 0.0
    %842 = vmatpush1.msra.mxu0 0.0
    %843 = vmatprep.subr.mxu0 0.0
    %844 = vmatpush1.msra.mxu0 0.0
    %845 = vmatprep.subr.mxu0 0.0
    %846 = vmatpush1.msra.mxu0 0.0
    %847 = vmatprep.subr.mxu0 0.0
    %848 = vmatpush1.msra.mxu0 0.0
    %849 = vmatprep.subr.mxu0 0.0
    %850 = vmatpush1.msra.mxu0 0.0
    %851 = vmatprep.subr.mxu0 0.0
    %852 = vmatpush1.msra.mxu0 0.0
    %853 = vmatprep.subr.mxu0 0.0
    %854 = vmatpush1.msra.mxu0 0.0
    %855 = vmatprep.mubr.f32.mxu0 0.0
    %856 = vmatmul.mubr.f32.gmra.mrb[0].mxu0 %v774
    %v857 = vpop.f32.mrb[0].mxu0
    %v858 = vadd.f32 0.0, %v857
    %v859 = vpop.f32.mrb[0].mxu0
    %860 = vdwg.mxu0
    %861 = vadd.xlane.f32.xlu0 %v858
    %v862 = vpop.xlane.xlu0 %861
    %v863 = vmul.f32 %v862, 0.125
    %v864 = vsub.f32 %v858, %v863
    %v865 = vmul.f32 %v864, %v864
    %866 = vadd.xlane.f32.xlu0 %v865
    %v867 = vpop.xlane.xlu0 %866
    %v868 = vmul.f32 %v863, 120.0
    %v869 = vmul.f32 %v868, %v863
    %v870 = vsub.f32 %v867, %v869
    %v871 = vmul.f32 %v870, 0.125
    %v872 = vadd.f32 %v871, 1e-05
    %v873 = vrsqrt.pop %v872
    %v874 = vmul.f32 %v864, %v873
    %875 = vst [vmem:[#allocation22] sm:$0xff] %v874
    // Predicated region
    $region86: #{tpu_custom_call.1} parent=1 // pred_check
      _
    $region87: #{tpu_custom_call.1} parent=1 // pred_check_branch
      %877 = sbr.rel (0) target = $region89
    $region88: #{tpu_custom_call.1} parent=1 // pred_region
      %s879 = ssub.s32 128, 128
      %880 = vsyncadd [#allocation4], %s879
      %s882 = sshll.u32 [#allocation16], 4
      %s883 = int_to_ptr.vmem [resolvable:$true] %s882
      %885 = dma.vmem_to_hbm [thread:$0]  %s883, 128, %s13, [#allocation4]
    $region89: #{tpu_custom_call.1} parent=1 // pred_fallthru
      _
    // Predicated region
    $region90: #{tpu_custom_call.1} parent=1 // pred_check
      _
    $region91: #{tpu_custom_call.1} parent=1 // pred_check_branch
      %887 = sbr.rel (0) target = $region93
    $region92: #{tpu_custom_call.1} parent=1 // pred_region
      %s889 = ssub.s32 128, 128
      %890 = vsyncadd [#allocation18], %s889
      %s892 = sshll.u32 [#allocation17], 4
      %s893 = int_to_ptr.vmem [resolvable:$true] %s892
      %895 = dma.vmem_to_hbm [thread:$0]  %s893, 128, %s14, [#allocation18]
    $region93: #{tpu_custom_call.1} parent=1 // pred_fallthru
      _
    // Predicated region
    $region94: #{tpu_custom_call.1} parent=1 // pred_check
      _
    $region95: #{tpu_custom_call.1} parent=1 // pred_check_branch
      %897 = sbr.rel (0) target = $region97
    $region96: #{tpu_custom_call.1} parent=1 // pred_region
      %s899 = ssub.s32 128, 128
      %900 = vsyncadd [#allocation18], %s899
      %s902 = sshll.u32 [#allocation19], 4
      %s903 = int_to_ptr.vmem [resolvable:$true] %s902
      %905 = dma.vmem_to_hbm [thread:$0]  %s903, 128, %s15, [#allocation18]
    $region97: #{tpu_custom_call.1} parent=1 // pred_fallthru
      _
    // Predicated region
    $region98: #{tpu_custom_call.1} parent=1 // pred_check
      _
    $region99: #{tpu_custom_call.1} parent=1 // pred_check_branch
      %907 = sbr.rel (0) target = $region101
    $region100: #{tpu_custom_call.1} parent=1 // pred_region
      %s909 = ssub.s32 128, 128
      %910 = vsyncadd [#allocation21], %s909
      %s912 = sshll.u32 [#allocation20], 4
      %s913 = int_to_ptr.vmem [resolvable:$true] %s912
      %915 = dma.vmem_to_hbm [thread:$0]  %s913, 128, %s16, [#allocation21]
    $region101: #{tpu_custom_call.1} parent=1 // pred_fallthru
      _
    // Predicated region
    $region102: #{tpu_custom_call.1} parent=1 // pred_check
      _
    $region103: #{tpu_custom_call.1} parent=1 // pred_check_branch
      %917 = sbr.rel (0) target = $region105
    $region104: #{tpu_custom_call.1} parent=1 // pred_region
      %s919 = ssub.s32 128, 128
      %920 = vsyncadd [#allocation21], %s919
      %s922 = sshll.u32 [#allocation22], 4
      %s923 = int_to_ptr.vmem [resolvable:$true] %s922
      %925 = dma.vmem_to_hbm [thread:$0]  %s923, 128, %s17, [#allocation21]
    $region105: #{tpu_custom_call.1} parent=1 // pred_fallthru
      _
    // Predicated region
    $region106: #{tpu_custom_call.1} parent=1 // pred_check
      _
    $region107: #{tpu_custom_call.1} parent=1 // pred_check_branch
      %927 = sbr.rel (0) target = $region109
    $region108: #{tpu_custom_call.1} parent=1 // pred_region
      %928 = dma.done [#allocation4], 128
    $region109: #{tpu_custom_call.1} parent=1 // pred_fallthru
      _
    // Predicated region
    $region110: #{tpu_custom_call.1} parent=1 // pred_check
      _
    $region111: #{tpu_custom_call.1} parent=1 // pred_check_branch
      %930 = sbr.rel (0) target = $region113
    $region112: #{tpu_custom_call.1} parent=1 // pred_region
      %931 = dma.done [#allocation18], 128
    $region113: #{tpu_custom_call.1} parent=1 // pred_fallthru
      _
    // Predicated region
    $region114: #{tpu_custom_call.1} parent=1 // pred_check
      _
    $region115: #{tpu_custom_call.1} parent=1 // pred_check_branch
      %933 = sbr.rel (0) target = $region117
    $region116: #{tpu_custom_call.1} parent=1 // pred_region
      %934 = dma.done [#allocation18], 128
    $region117: #{tpu_custom_call.1} parent=1 // pred_fallthru
      _
    // Predicated region
    $region118: #{tpu_custom_call.1} parent=1 // pred_check
      _
    $region119: #{tpu_custom_call.1} parent=1 // pred_check_branch
      %936 = sbr.rel (0) target = $region121
    $region120: #{tpu_custom_call.1} parent=1 // pred_region
      %937 = dma.done [#allocation21], 128
    $region121: #{tpu_custom_call.1} parent=1 // pred_fallthru
      _
    // Predicated region
    $region122: #{tpu_custom_call.1} parent=1 // pred_check
      _
    $region123: #{tpu_custom_call.1} parent=1 // pred_check_branch
      %939 = sbr.rel (0) target = $region125
    $region124: #{tpu_custom_call.1} parent=1 // pred_region
      %940 = dma.done [#allocation21], 128
    $region125: #{tpu_custom_call.1} parent=1 // pred_fallthru
      _
    %941 = vsyncpa [#allocation3], 1
    %942 = vsyncpa [#allocation6], 1
    %943 = vsyncpa [#allocation9], 1
    %944 = vsyncpa [#allocation12], 1
    %945 = vsyncpa [#allocation15], 1
    %946 = vsyncpa [#allocation4], 1
    %947 = vsyncpa [#allocation18], 1
    %948 = vsyncpa [#allocation21], 1

</llo_original>
